<compile_context>
chip_gen: v5e
topology: v5e:2x2
jax: 0.10.0
libtpu: 0.0.40
codegen_flags: <defaults>
</compile_context>

<pallas_src>
import functools

import jax
import jax.numpy as jnp
from jax import lax
from jax.experimental import pallas as pl
from jax.experimental.pallas import tpu as pltpu

HIDDEN_SIZE = 128
INPUT_SIZE = 1
NUM_LAYERS = 2


def _rnn_kernel(x_ref,        # (Ts, B, 1)  f32   input chunk (time-major)
                wih0_ref,     # (1, H)            layer-0 input weight row
                whh_bd_ref,   # (2H, 2H)          blockdiag(Whh0^T, Whh1^T)
                wih1_ref,     # (H, H)            W_ih1^T
                b0_ref,       # (1, H)            b_ih0 + b_hh0
                b1_ref,       # (1, H)            b_ih1 + b_hh1
                out_ref,      # (Ts, B, H)        output chunk
                hn_ref,       # (L, B, H)         final hidden state
                h_scr,        # VMEM (B, 2H)      [h0 | h1], persists across grid
                xw0_scr):     # VMEM (Ts, B, H)   precomputed layer-0 input term
    s = pl.program_id(0)
    seq_tile, batch, _ = x_ref.shape
    hid = wih1_ref.shape[0]

    # Zero initial hidden state on the first sequence chunk only.
    @pl.when(s == 0)
    def _():
        h_scr[...] = jnp.zeros_like(h_scr)

    # Layer-0 input contribution + fused bias for the whole chunk, on the VPU
    # (keeps the K=1 matmul off the MXU and off the per-step critical path).
    xw0_scr[...] = (x_ref[...] * wih0_ref[...].reshape(1, 1, hid)
                    + b0_ref[...].reshape(1, 1, hid))

    # Hoist the layer-1 bias broadcast out of the time loop.
    b1 = jnp.broadcast_to(b1_ref[...], (batch, hid))

    def step(t, carry):
        # Fused recurrent matmul: [h0 | h1](t-1) @ blockdiag(Whh0^T, Whh1^T).
        rec = jnp.dot(h_scr[...], whh_bd_ref[...],
                      preferred_element_type=jnp.float32)        # (B, 2H)
        # Layer 0.
        h0_new = jnp.tanh(xw0_scr[t] + rec[:, :hid])             # (B, H)
        # Layer 1 (input term needs h0(t), recurrent term already in rec).
        pre1 = (jnp.dot(h0_new, wih1_ref[...],
                        preferred_element_type=jnp.float32)
                + rec[:, hid:] + b1)
        h1_new = jnp.tanh(pre1)                                   # (B, H)

        h_scr[:, :hid] = h0_new
        h_scr[:, hid:] = h1_new
        out_ref[t] = h1_new
        return carry

    if seq_tile <= 8:
        unroll = seq_tile
    elif seq_tile % 4 == 0:
        unroll = 4
    elif seq_tile % 2 == 0:
        unroll = 2
    else:
        unroll = 1
    lax.fori_loop(0, seq_tile, step, 0, unroll=unroll)

    # Emit final hidden state only on the last chunk.
    @pl.when(s == pl.num_programs(0) - 1)
    def _():
        hn_ref[0] = h_scr[:, :hid]
        hn_ref[1] = h_scr[:, hid:]


def _pick_seq_tile(S, B, H, budget_bytes=12 * 1024 * 1024):
    """Largest divisor of S (capped at 256) whose chunk VMEM footprint fits."""
    per_t = 3 * B * H * 4 + 2 * B * 4   # dbl-buffered out + xw0 scratch + x
    ts_cap = max(1, min(256, S, budget_bytes // max(per_t, 1)))
    for ts in range(ts_cap, 0, -1):
        if S % ts == 0:
            return ts
    return 1


@jax.jit
def rnn_forward(x, params):
    """x: (B, S, INPUT_SIZE) float32, batch_first like PyTorch.

    Returns (output, h_n):
      output: (B, S, HIDDEN_SIZE)
      h_n:    (NUM_LAYERS, B, HIDDEN_SIZE)
    """
    (w_ih0, w_hh0, b_ih0, b_hh0, w_ih1, w_hh1, b_ih1, b_hh1) = params
    B, S, I = x.shape
    H = HIDDEN_SIZE
    assert I == INPUT_SIZE == 1

    Ts = _pick_seq_tile(S, B, H)
    grid = (S // Ts,)

    # Time-major input (tiny: S*B*4 bytes since I == 1).
    x_tm = jnp.transpose(x, (1, 0, 2)).astype(jnp.float32)        # (S, B, 1)

    # Weight prep: row vector for layer-0 input, block-diagonal recurrent
    # weight, transposed layer-1 input weight, pre-summed biases.
    wih0_row = jnp.reshape(w_ih0, (1, H)).astype(jnp.float32)     # (1, H)
    whh_bd = jnp.zeros((2 * H, 2 * H), jnp.float32)
    whh_bd = whh_bd.at[:H, :H].set(w_hh0.T).at[H:, H:].set(w_hh1.T)
    wih1_t = w_ih1.T.astype(jnp.float32)                          # (H, H)
    b0 = (b_ih0 + b_hh0).reshape(1, H).astype(jnp.float32)
    b1 = (b_ih1 + b_hh1).reshape(1, H).astype(jnp.float32)

    grid_spec = pltpu.PrefetchScalarGridSpec(
        num_scalar_prefetch=0,
        grid=grid,
        in_specs=[
            pl.BlockSpec((Ts, B, I), lambda s: (s, 0, 0)),          # x chunk
            pl.BlockSpec((1, H), lambda s: (0, 0)),                 # wih0 row
            pl.BlockSpec((2 * H, 2 * H), lambda s: (0, 0)),         # whh blkdiag
            pl.BlockSpec((H, H), lambda s: (0, 0)),                 # wih1^T
            pl.BlockSpec((1, H), lambda s: (0, 0)),                 # b0
            pl.BlockSpec((1, H), lambda s: (0, 0)),                 # b1
        ],
        out_specs=(
            pl.BlockSpec((Ts, B, H), lambda s: (s, 0, 0)),          # out chunk
            pl.BlockSpec((NUM_LAYERS, B, H), lambda s: (0, 0, 0)),  # h_n
        ),
        scratch_shapes=[
            pltpu.VMEM((B, 2 * H), jnp.float32),     # persistent [h0|h1]
            pltpu.VMEM((Ts, B, H), jnp.float32),     # layer-0 input term
        ],
    )

    out_tm, h_n = pl.pallas_call(
        _rnn_kernel,
        out_shape=(
            jax.ShapeDtypeStruct((S, B, H), jnp.float32),
            jax.ShapeDtypeStruct((NUM_LAYERS, B, H), jnp.float32),
        ),
        grid_spec=grid_spec,
        compiler_params=pltpu.CompilerParams(
            dimension_semantics=("arbitrary",),
            vmem_limit_bytes=32 * 1024 * 1024,
        ),
    )(x_tm, wih0_row, whh_bd, wih1_t, b0, b1)

    output = jnp.transpose(out_tm, (1, 0, 2))                      # (B, S, H)
    return output, h_n


def init_params(key):
    """Deterministic init matching nn.RNN parameter shapes:
       uniform(-1/sqrt(H), 1/sqrt(H))."""
    H, I = HIDDEN_SIZE, INPUT_SIZE
    bound = 1.0 / jnp.sqrt(jnp.float32(H))
    shapes = [
        (H, I), (H, H), (H,), (H,),      # layer 0: W_ih, W_hh, b_ih, b_hh
        (H, H), (H, H), (H,), (H,),      # layer 1
    ]
    keys = jax.random.split(key, len(shapes))
    return tuple(
        jax.random.uniform(k, s, jnp.float32, -bound, bound)
        for k, s in zip(keys, shapes)
    )


def rnn_reference(x, params):
    """Pure-JAX reference (mirrors torch.nn.RNN with tanh, batch_first)."""
    (w_ih0, w_hh0, b_ih0, b_hh0, w_ih1, w_hh1, b_ih1, b_hh1) = params
    B, S, _ = x.shape
    H = HIDDEN_SIZE
    h0 = jnp.zeros((B, H), jnp.float32)
    h1 = jnp.zeros((B, H), jnp.float32)

    def step(carry, x_t):
        h0, h1 = carry
        h0 = jnp.tanh(x_t @ w_ih0.T + b_ih0 + h0 @ w_hh0.T + b_hh0)
        h1 = jnp.tanh(h0 @ w_ih1.T + b_ih1 + h1 @ w_hh1.T + b_hh1)
        return (h0, h1), h1

    (h0, h1), ys = lax.scan(step, (h0, h1), jnp.transpose(x, (1, 0, 2)))
    return jnp.transpose(ys, (1, 0, 2)), jnp.stack([h0, h1])


if __name__ == "__main__":
    key = jax.random.PRNGKey(0)
    k_param, k_x = jax.random.split(key)

    params = init_params(k_param)

    batch, seq = 2, 8
    x = jax.random.normal(k_x, (batch, seq, INPUT_SIZE), jnp.float32)

    out, h_n = rnn_forward(x, params)
    out, h_n = jax.block_until_ready((out, h_n))

    ref_out, ref_hn = rnn_reference(x, params)
    assert out.shape == (batch, seq, HIDDEN_SIZE)
    assert h_n.shape == (NUM_LAYERS, batch, HIDDEN_SIZE)
    assert jnp.allclose(out, ref_out, atol=1e-5, rtol=1e-5)
    assert jnp.allclose(h_n, ref_hn, atol=1e-5, rtol=1e-5)

    print("KERNEL_OK")
</pallas_src>

<mosaic_0001>
module attributes {stable_mosaic.version = 11 : i64} {
  func.func @_rnn_kernel(%arg0: i32, %arg1: memref<8x2x1xf32, #tpu.memory_space<vmem>>, %arg2: memref<1x128xf32, #tpu.memory_space<vmem>>, %arg3: memref<256x256xf32, #tpu.memory_space<vmem>>, %arg4: memref<128x128xf32, #tpu.memory_space<vmem>>, %arg5: memref<1x128xf32, #tpu.memory_space<vmem>>, %arg6: memref<1x128xf32, #tpu.memory_space<vmem>>, %arg7: memref<8x2x128xf32, #tpu.memory_space<vmem>>, %arg8: memref<2x2x128xf32, #tpu.memory_space<vmem>>, %arg9: memref<2x256xf32, #tpu.memory_space<vmem>>, %arg10: memref<8x2x128xf32, #tpu.memory_space<vmem>>) attributes {dimension_semantics = [#tpu.dimension_semantics<arbitrary>], iteration_bounds = array<i64: 1>, scalar_prefetch = 0 : i64, scratch_operands = 2 : i64, tpu.core_type = #tpu.core_type<tc>, window_params = [{transform_indices = @transform_0, window_bounds = array<i64: 8, 2, 1>}, {pipeline_mode = #tpu.pipeline_mode<synchronous>, transform_indices = @transform_1, window_bounds = array<i64: 1, 128>}, {pipeline_mode = #tpu.pipeline_mode<synchronous>, transform_indices = @transform_2, window_bounds = array<i64: 256, 256>}, {pipeline_mode = #tpu.pipeline_mode<synchronous>, transform_indices = @transform_3, window_bounds = array<i64: 128, 128>}, {pipeline_mode = #tpu.pipeline_mode<synchronous>, transform_indices = @transform_4, window_bounds = array<i64: 1, 128>}, {pipeline_mode = #tpu.pipeline_mode<synchronous>, transform_indices = @transform_5, window_bounds = array<i64: 1, 128>}, {transform_indices = @transform_6, window_bounds = array<i64: 8, 2, 128>}, {pipeline_mode = #tpu.pipeline_mode<synchronous>, transform_indices = @transform_7, window_bounds = array<i64: 2, 2, 128>}]} {
    %c0_i32 = arith.constant 0 : i32
    %0 = arith.cmpi eq, %arg0, %c0_i32 : i32
    %1 = arith.extui %0 : i1 to i32
    %c0_i32_0 = arith.constant 0 : i32
    %2 = arith.cmpi ne, %1, %c0_i32_0 : i32
    scf.if %2 {
      %cst_141 = arith.constant 0.000000e+00 : f32
      %188 = vector.broadcast %cst_141 : f32 to vector<2x256xf32>
      %c0_142 = arith.constant 0 : index
      %c0_143 = arith.constant 0 : index
      %189 = vector.load %arg9[%c0_142, %c0_143] : memref<2x256xf32, #tpu.memory_space<vmem>>, vector<2x256xf32>
      tpu.vector_store %arg9[%c0_142, %c0_143], %188 {strides = array<i32>} : memref<2x256xf32, #tpu.memory_space<vmem>>, vector<2x256xf32>,
    } else {
    }
    %c0 = arith.constant 0 : index
    %c0_1 = arith.constant 0 : index
    %c0_2 = arith.constant 0 : index
    %3 = vector.load %arg1[%c0, %c0_1, %c0_2] : memref<8x2x1xf32, #tpu.memory_space<vmem>>, vector<8x2x1xf32>
    %c0_3 = arith.constant 0 : index
    %c0_4 = arith.constant 0 : index
    %4 = vector.load %arg2[%c0_3, %c0_4] : memref<1x128xf32, #tpu.memory_space<vmem>>, vector<1x128xf32>
    %5 = vector.shape_cast %4 : vector<1x128xf32> to vector<1x1x128xf32>
    %6 = vector.broadcast %3 : vector<8x2x1xf32> to vector<8x2x128xf32>
    %7 = vector.broadcast %5 : vector<1x1x128xf32> to vector<8x2x128xf32>
    %8 = arith.mulf %6, %7 : vector<8x2x128xf32>
    %c0_5 = arith.constant 0 : index
    %c0_6 = arith.constant 0 : index
    %9 = vector.load %arg5[%c0_5, %c0_6] : memref<1x128xf32, #tpu.memory_space<vmem>>, vector<1x128xf32>
    %10 = vector.shape_cast %9 : vector<1x128xf32> to vector<1x1x128xf32>
    %11 = vector.broadcast %10 : vector<1x1x128xf32> to vector<8x2x128xf32>
    %12 = arith.addf %8, %11 : vector<8x2x128xf32>
    %c0_7 = arith.constant 0 : index
    %c0_8 = arith.constant 0 : index
    %c0_9 = arith.constant 0 : index
    %13 = vector.load %arg10[%c0_7, %c0_8, %c0_9] : memref<8x2x128xf32, #tpu.memory_space<vmem>>, vector<8x2x128xf32>
    tpu.vector_store %arg10[%c0_7, %c0_8, %c0_9], %12 {strides = array<i32>} : memref<8x2x128xf32, #tpu.memory_space<vmem>>, vector<8x2x128xf32>,
    %c0_10 = arith.constant 0 : index
    %c0_11 = arith.constant 0 : index
    %14 = vector.load %arg6[%c0_10, %c0_11] : memref<1x128xf32, #tpu.memory_space<vmem>>, vector<1x128xf32>
    %15 = vector.shape_cast %14 : vector<1x128xf32> to vector<1x128xf32>
    %16 = vector.broadcast %15 : vector<1x128xf32> to vector<2x128xf32>
    %c0_i32_12 = arith.constant 0 : i32
    %c0_13 = arith.constant 0 : index
    %c0_14 = arith.constant 0 : index
    %17 = vector.load %arg9[%c0_13, %c0_14] : memref<2x256xf32, #tpu.memory_space<vmem>>, vector<2x256xf32>
    %c0_15 = arith.constant 0 : index
    %c0_16 = arith.constant 0 : index
    %18 = vector.load %arg3[%c0_15, %c0_16] : memref<256x256xf32, #tpu.memory_space<vmem>>, vector<256x256xf32>
    %cst = arith.constant dense<0.000000e+00> : vector<2x256xf32>
    %19 = tpu.matmul %17, %18, %cst {dimension_numbers = #tpu.dot_dimension_numbers<[1], [0], [0], [1], [0, 0, 1, 1], [], []>} : vector<2x256xf32>, vector<256x256xf32>, vector<2x256xf32> -> vector<2x256xf32>
    %20 = arith.index_cast %c0_i32_12 : i32 to index
    %c0_17 = arith.constant 0 : index
    %c0_18 = arith.constant 0 : index
    %21 = vector.load %arg10[%20, %c0_17, %c0_18] : memref<8x2x128xf32, #tpu.memory_space<vmem>>, vector<1x2x128xf32>
    %22 = vector.shape_cast %21 : vector<1x2x128xf32> to vector<2x128xf32>
    %23 = vector.extract_strided_slice %19 {offsets = [0, 0], sizes = [2, 128], strides = [1, 1]} : vector<2x256xf32> to vector<2x128xf32>
    %24 = arith.addf %22, %23 : vector<2x128xf32>
    %25 = math.tanh %24 : vector<2x128xf32>
    %c0_19 = arith.constant 0 : index
    %c0_20 = arith.constant 0 : index
    %26 = vector.load %arg4[%c0_19, %c0_20] : memref<128x128xf32, #tpu.memory_space<vmem>>, vector<128x128xf32>
    %cst_21 = arith.constant dense<0.000000e+00> : vector<2x128xf32>
    %27 = tpu.matmul %25, %26, %cst_21 {dimension_numbers = #tpu.dot_dimension_numbers<[1], [0], [0], [1], [0, 0, 1, 1], [], []>} : vector<2x128xf32>, vector<128x128xf32>, vector<2x128xf32> -> vector<2x128xf32>
    %28 = vector.extract_strided_slice %19 {offsets = [0, 128], sizes = [2, 128], strides = [1, 1]} : vector<2x256xf32> to vector<2x128xf32>
    %29 = arith.addf %27, %28 : vector<2x128xf32>
    %30 = arith.addf %29, %16 : vector<2x128xf32>
    %31 = math.tanh %30 : vector<2x128xf32>
    %c0_22 = arith.constant 0 : index
    %c0_23 = arith.constant 0 : index
    %32 = vector.load %arg9[%c0_22, %c0_23] : memref<2x256xf32, #tpu.memory_space<vmem>>, vector<2x128xf32>
    tpu.vector_store %arg9[%c0_22, %c0_23], %25 {strides = array<i32>} : memref<2x256xf32, #tpu.memory_space<vmem>>, vector<2x128xf32>,
    %c0_24 = arith.constant 0 : index
    %c128 = arith.constant 128 : index
    %33 = vector.load %arg9[%c0_24, %c128] : memref<2x256xf32, #tpu.memory_space<vmem>>, vector<2x128xf32>
    tpu.vector_store %arg9[%c0_24, %c128], %31 {strides = array<i32>} : memref<2x256xf32, #tpu.memory_space<vmem>>, vector<2x128xf32>,
    %34 = arith.index_cast %c0_i32_12 : i32 to index
    %c0_25 = arith.constant 0 : index
    %c0_26 = arith.constant 0 : index
    %35 = vector.load %arg7[%34, %c0_25, %c0_26] : memref<8x2x128xf32, #tpu.memory_space<vmem>>, vector<1x2x128xf32>
    %36 = vector.shape_cast %35 : vector<1x2x128xf32> to vector<2x128xf32>
    %37 = vector.shape_cast %31 : vector<2x128xf32> to vector<1x2x128xf32>
    tpu.vector_store %arg7[%34, %c0_25, %c0_26], %37 {strides = array<i32>} : memref<8x2x128xf32, #tpu.memory_space<vmem>>, vector<1x2x128xf32>,
    %c1_i32 = arith.constant 1 : i32
    %c0_27 = arith.constant 0 : index
    %c0_28 = arith.constant 0 : index
    %38 = vector.load %arg9[%c0_27, %c0_28] : memref<2x256xf32, #tpu.memory_space<vmem>>, vector<2x256xf32>
    %c0_29 = arith.constant 0 : index
    %c0_30 = arith.constant 0 : index
    %39 = vector.load %arg3[%c0_29, %c0_30] : memref<256x256xf32, #tpu.memory_space<vmem>>, vector<256x256xf32>
    %cst_31 = arith.constant dense<0.000000e+00> : vector<2x256xf32>
    %40 = tpu.matmul %38, %39, %cst_31 {dimension_numbers = #tpu.dot_dimension_numbers<[1], [0], [0], [1], [0, 0, 1, 1], [], []>} : vector<2x256xf32>, vector<256x256xf32>, vector<2x256xf32> -> vector<2x256xf32>
    %41 = arith.index_cast %c1_i32 : i32 to index
    %c0_32 = arith.constant 0 : index
    %c0_33 = arith.constant 0 : index
    %42 = vector.load %arg10[%41, %c0_32, %c0_33] : memref<8x2x128xf32, #tpu.memory_space<vmem>>, vector<1x2x128xf32>
    %43 = vector.shape_cast %42 : vector<1x2x128xf32> to vector<2x128xf32>
    %44 = vector.extract_strided_slice %40 {offsets = [0, 0], sizes = [2, 128], strides = [1, 1]} : vector<2x256xf32> to vector<2x128xf32>
    %45 = arith.addf %43, %44 : vector<2x128xf32>
    %46 = math.tanh %45 : vector<2x128xf32>
    %c0_34 = arith.constant 0 : index
    %c0_35 = arith.constant 0 : index
    %47 = vector.load %arg4[%c0_34, %c0_35] : memref<128x128xf32, #tpu.memory_space<vmem>>, vector<128x128xf32>
    %cst_36 = arith.constant dense<0.000000e+00> : vector<2x128xf32>
    %48 = tpu.matmul %46, %47, %cst_36 {dimension_numbers = #tpu.dot_dimension_numbers<[1], [0], [0], [1], [0, 0, 1, 1], [], []>} : vector<2x128xf32>, vector<128x128xf32>, vector<2x128xf32> -> vector<2x128xf32>
    %49 = vector.extract_strided_slice %40 {offsets = [0, 128], sizes = [2, 128], strides = [1, 1]} : vector<2x256xf32> to vector<2x128xf32>
    %50 = arith.addf %48, %49 : vector<2x128xf32>
    %51 = arith.addf %50, %16 : vector<2x128xf32>
    %52 = math.tanh %51 : vector<2x128xf32>
    %c0_37 = arith.constant 0 : index
    %c0_38 = arith.constant 0 : index
    %53 = vector.load %arg9[%c0_37, %c0_38] : memref<2x256xf32, #tpu.memory_space<vmem>>, vector<2x128xf32>
    tpu.vector_store %arg9[%c0_37, %c0_38], %46 {strides = array<i32>} : memref<2x256xf32, #tpu.memory_space<vmem>>, vector<2x128xf32>,
    %c0_39 = arith.constant 0 : index
    %c128_40 = arith.constant 128 : index
    %54 = vector.load %arg9[%c0_39, %c128_40] : memref<2x256xf32, #tpu.memory_space<vmem>>, vector<2x128xf32>
    tpu.vector_store %arg9[%c0_39, %c128_40], %52 {strides = array<i32>} : memref<2x256xf32, #tpu.memory_space<vmem>>, vector<2x128xf32>,
    %55 = arith.index_cast %c1_i32 : i32 to index
    %c0_41 = arith.constant 0 : index
    %c0_42 = arith.constant 0 : index
    %56 = vector.load %arg7[%55, %c0_41, %c0_42] : memref<8x2x128xf32, #tpu.memory_space<vmem>>, vector<1x2x128xf32>
    %57 = vector.shape_cast %56 : vector<1x2x128xf32> to vector<2x128xf32>
    %58 = vector.shape_cast %52 : vector<2x128xf32> to vector<1x2x128xf32>
    tpu.vector_store %arg7[%55, %c0_41, %c0_42], %58 {strides = array<i32>} : memref<8x2x128xf32, #tpu.memory_space<vmem>>, vector<1x2x128xf32>,
    %c2_i32 = arith.constant 2 : i32
    %c0_43 = arith.constant 0 : index
    %c0_44 = arith.constant 0 : index
    %59 = vector.load %arg9[%c0_43, %c0_44] : memref<2x256xf32, #tpu.memory_space<vmem>>, vector<2x256xf32>
    %c0_45 = arith.constant 0 : index
    %c0_46 = arith.constant 0 : index
    %60 = vector.load %arg3[%c0_45, %c0_46] : memref<256x256xf32, #tpu.memory_space<vmem>>, vector<256x256xf32>
    %cst_47 = arith.constant dense<0.000000e+00> : vector<2x256xf32>
    %61 = tpu.matmul %59, %60, %cst_47 {dimension_numbers = #tpu.dot_dimension_numbers<[1], [0], [0], [1], [0, 0, 1, 1], [], []>} : vector<2x256xf32>, vector<256x256xf32>, vector<2x256xf32> -> vector<2x256xf32>
    %62 = arith.index_cast %c2_i32 : i32 to index
    %c0_48 = arith.constant 0 : index
    %c0_49 = arith.constant 0 : index
    %63 = vector.load %arg10[%62, %c0_48, %c0_49] : memref<8x2x128xf32, #tpu.memory_space<vmem>>, vector<1x2x128xf32>
    %64 = vector.shape_cast %63 : vector<1x2x128xf32> to vector<2x128xf32>
    %65 = vector.extract_strided_slice %61 {offsets = [0, 0], sizes = [2, 128], strides = [1, 1]} : vector<2x256xf32> to vector<2x128xf32>
    %66 = arith.addf %64, %65 : vector<2x128xf32>
    %67 = math.tanh %66 : vector<2x128xf32>
    %c0_50 = arith.constant 0 : index
    %c0_51 = arith.constant 0 : index
    %68 = vector.load %arg4[%c0_50, %c0_51] : memref<128x128xf32, #tpu.memory_space<vmem>>, vector<128x128xf32>
    %cst_52 = arith.constant dense<0.000000e+00> : vector<2x128xf32>
    %69 = tpu.matmul %67, %68, %cst_52 {dimension_numbers = #tpu.dot_dimension_numbers<[1], [0], [0], [1], [0, 0, 1, 1], [], []>} : vector<2x128xf32>, vector<128x128xf32>, vector<2x128xf32> -> vector<2x128xf32>
    %70 = vector.extract_strided_slice %61 {offsets = [0, 128], sizes = [2, 128], strides = [1, 1]} : vector<2x256xf32> to vector<2x128xf32>
    %71 = arith.addf %69, %70 : vector<2x128xf32>
    %72 = arith.addf %71, %16 : vector<2x128xf32>
    %73 = math.tanh %72 : vector<2x128xf32>
    %c0_53 = arith.constant 0 : index
    %c0_54 = arith.constant 0 : index
    %74 = vector.load %arg9[%c0_53, %c0_54] : memref<2x256xf32, #tpu.memory_space<vmem>>, vector<2x128xf32>
    tpu.vector_store %arg9[%c0_53, %c0_54], %67 {strides = array<i32>} : memref<2x256xf32, #tpu.memory_space<vmem>>, vector<2x128xf32>,
    %c0_55 = arith.constant 0 : index
    %c128_56 = arith.constant 128 : index
    %75 = vector.load %arg9[%c0_55, %c128_56] : memref<2x256xf32, #tpu.memory_space<vmem>>, vector<2x128xf32>
    tpu.vector_store %arg9[%c0_55, %c128_56], %73 {strides = array<i32>} : memref<2x256xf32, #tpu.memory_space<vmem>>, vector<2x128xf32>,
    %76 = arith.index_cast %c2_i32 : i32 to index
    %c0_57 = arith.constant 0 : index
    %c0_58 = arith.constant 0 : index
    %77 = vector.load %arg7[%76, %c0_57, %c0_58] : memref<8x2x128xf32, #tpu.memory_space<vmem>>, vector<1x2x128xf32>
    %78 = vector.shape_cast %77 : vector<1x2x128xf32> to vector<2x128xf32>
    %79 = vector.shape_cast %73 : vector<2x128xf32> to vector<1x2x128xf32>
    tpu.vector_store %arg7[%76, %c0_57, %c0_58], %79 {strides = array<i32>} : memref<8x2x128xf32, #tpu.memory_space<vmem>>, vector<1x2x128xf32>,
    %c3_i32 = arith.constant 3 : i32
    %c0_59 = arith.constant 0 : index
    %c0_60 = arith.constant 0 : index
    %80 = vector.load %arg9[%c0_59, %c0_60] : memref<2x256xf32, #tpu.memory_space<vmem>>, vector<2x256xf32>
    %c0_61 = arith.constant 0 : index
    %c0_62 = arith.constant 0 : index
    %81 = vector.load %arg3[%c0_61, %c0_62] : memref<256x256xf32, #tpu.memory_space<vmem>>, vector<256x256xf32>
    %cst_63 = arith.constant dense<0.000000e+00> : vector<2x256xf32>
    %82 = tpu.matmul %80, %81, %cst_63 {dimension_numbers = #tpu.dot_dimension_numbers<[1], [0], [0], [1], [0, 0, 1, 1], [], []>} : vector<2x256xf32>, vector<256x256xf32>, vector<2x256xf32> -> vector<2x256xf32>
    %83 = arith.index_cast %c3_i32 : i32 to index
    %c0_64 = arith.constant 0 : index
    %c0_65 = arith.constant 0 : index
    %84 = vector.load %arg10[%83, %c0_64, %c0_65] : memref<8x2x128xf32, #tpu.memory_space<vmem>>, vector<1x2x128xf32>
    %85 = vector.shape_cast %84 : vector<1x2x128xf32> to vector<2x128xf32>
    %86 = vector.extract_strided_slice %82 {offsets = [0, 0], sizes = [2, 128], strides = [1, 1]} : vector<2x256xf32> to vector<2x128xf32>
    %87 = arith.addf %85, %86 : vector<2x128xf32>
    %88 = math.tanh %87 : vector<2x128xf32>
    %c0_66 = arith.constant 0 : index
    %c0_67 = arith.constant 0 : index
    %89 = vector.load %arg4[%c0_66, %c0_67] : memref<128x128xf32, #tpu.memory_space<vmem>>, vector<128x128xf32>
    %cst_68 = arith.constant dense<0.000000e+00> : vector<2x128xf32>
    %90 = tpu.matmul %88, %89, %cst_68 {dimension_numbers = #tpu.dot_dimension_numbers<[1], [0], [0], [1], [0, 0, 1, 1], [], []>} : vector<2x128xf32>, vector<128x128xf32>, vector<2x128xf32> -> vector<2x128xf32>
    %91 = vector.extract_strided_slice %82 {offsets = [0, 128], sizes = [2, 128], strides = [1, 1]} : vector<2x256xf32> to vector<2x128xf32>
    %92 = arith.addf %90, %91 : vector<2x128xf32>
    %93 = arith.addf %92, %16 : vector<2x128xf32>
    %94 = math.tanh %93 : vector<2x128xf32>
    %c0_69 = arith.constant 0 : index
    %c0_70 = arith.constant 0 : index
    %95 = vector.load %arg9[%c0_69, %c0_70] : memref<2x256xf32, #tpu.memory_space<vmem>>, vector<2x128xf32>
    tpu.vector_store %arg9[%c0_69, %c0_70], %88 {strides = array<i32>} : memref<2x256xf32, #tpu.memory_space<vmem>>, vector<2x128xf32>,
    %c0_71 = arith.constant 0 : index
    %c128_72 = arith.constant 128 : index
    %96 = vector.load %arg9[%c0_71, %c128_72] : memref<2x256xf32, #tpu.memory_space<vmem>>, vector<2x128xf32>
    tpu.vector_store %arg9[%c0_71, %c128_72], %94 {strides = array<i32>} : memref<2x256xf32, #tpu.memory_space<vmem>>, vector<2x128xf32>,
    %97 = arith.index_cast %c3_i32 : i32 to index
    %c0_73 = arith.constant 0 : index
    %c0_74 = arith.constant 0 : index
    %98 = vector.load %arg7[%97, %c0_73, %c0_74] : memref<8x2x128xf32, #tpu.memory_space<vmem>>, vector<1x2x128xf32>
    %99 = vector.shape_cast %98 : vector<1x2x128xf32> to vector<2x128xf32>
    %100 = vector.shape_cast %94 : vector<2x128xf32> to vector<1x2x128xf32>
    tpu.vector_store %arg7[%97, %c0_73, %c0_74], %100 {strides = array<i32>} : memref<8x2x128xf32, #tpu.memory_space<vmem>>, vector<1x2x128xf32>,
    %c4_i32 = arith.constant 4 : i32
    %c0_75 = arith.constant 0 : index
    %c0_76 = arith.constant 0 : index
    %101 = vector.load %arg9[%c0_75, %c0_76] : memref<2x256xf32, #tpu.memory_space<vmem>>, vector<2x256xf32>
    %c0_77 = arith.constant 0 : index
    %c0_78 = arith.constant 0 : index
    %102 = vector.load %arg3[%c0_77, %c0_78] : memref<256x256xf32, #tpu.memory_space<vmem>>, vector<256x256xf32>
    %cst_79 = arith.constant dense<0.000000e+00> : vector<2x256xf32>
    %103 = tpu.matmul %101, %102, %cst_79 {dimension_numbers = #tpu.dot_dimension_numbers<[1], [0], [0], [1], [0, 0, 1, 1], [], []>} : vector<2x256xf32>, vector<256x256xf32>, vector<2x256xf32> -> vector<2x256xf32>
    %104 = arith.index_cast %c4_i32 : i32 to index
    %c0_80 = arith.constant 0 : index
    %c0_81 = arith.constant 0 : index
    %105 = vector.load %arg10[%104, %c0_80, %c0_81] : memref<8x2x128xf32, #tpu.memory_space<vmem>>, vector<1x2x128xf32>
    %106 = vector.shape_cast %105 : vector<1x2x128xf32> to vector<2x128xf32>
    %107 = vector.extract_strided_slice %103 {offsets = [0, 0], sizes = [2, 128], strides = [1, 1]} : vector<2x256xf32> to vector<2x128xf32>
    %108 = arith.addf %106, %107 : vector<2x128xf32>
    %109 = math.tanh %108 : vector<2x128xf32>
    %c0_82 = arith.constant 0 : index
    %c0_83 = arith.constant 0 : index
    %110 = vector.load %arg4[%c0_82, %c0_83] : memref<128x128xf32, #tpu.memory_space<vmem>>, vector<128x128xf32>
    %cst_84 = arith.constant dense<0.000000e+00> : vector<2x128xf32>
    %111 = tpu.matmul %109, %110, %cst_84 {dimension_numbers = #tpu.dot_dimension_numbers<[1], [0], [0], [1], [0, 0, 1, 1], [], []>} : vector<2x128xf32>, vector<128x128xf32>, vector<2x128xf32> -> vector<2x128xf32>
    %112 = vector.extract_strided_slice %103 {offsets = [0, 128], sizes = [2, 128], strides = [1, 1]} : vector<2x256xf32> to vector<2x128xf32>
    %113 = arith.addf %111, %112 : vector<2x128xf32>
    %114 = arith.addf %113, %16 : vector<2x128xf32>
    %115 = math.tanh %114 : vector<2x128xf32>
    %c0_85 = arith.constant 0 : index
    %c0_86 = arith.constant 0 : index
    %116 = vector.load %arg9[%c0_85, %c0_86] : memref<2x256xf32, #tpu.memory_space<vmem>>, vector<2x128xf32>
    tpu.vector_store %arg9[%c0_85, %c0_86], %109 {strides = array<i32>} : memref<2x256xf32, #tpu.memory_space<vmem>>, vector<2x128xf32>,
    %c0_87 = arith.constant 0 : index
    %c128_88 = arith.constant 128 : index
    %117 = vector.load %arg9[%c0_87, %c128_88] : memref<2x256xf32, #tpu.memory_space<vmem>>, vector<2x128xf32>
    tpu.vector_store %arg9[%c0_87, %c128_88], %115 {strides = array<i32>} : memref<2x256xf32, #tpu.memory_space<vmem>>, vector<2x128xf32>,
    %118 = arith.index_cast %c4_i32 : i32 to index
    %c0_89 = arith.constant 0 : index
    %c0_90 = arith.constant 0 : index
    %119 = vector.load %arg7[%118, %c0_89, %c0_90] : memref<8x2x128xf32, #tpu.memory_space<vmem>>, vector<1x2x128xf32>
    %120 = vector.shape_cast %119 : vector<1x2x128xf32> to vector<2x128xf32>
    %121 = vector.shape_cast %115 : vector<2x128xf32> to vector<1x2x128xf32>
    tpu.vector_store %arg7[%118, %c0_89, %c0_90], %121 {strides = array<i32>} : memref<8x2x128xf32, #tpu.memory_space<vmem>>, vector<1x2x128xf32>,
    %c5_i32 = arith.constant 5 : i32
    %c0_91 = arith.constant 0 : index
    %c0_92 = arith.constant 0 : index
    %122 = vector.load %arg9[%c0_91, %c0_92] : memref<2x256xf32, #tpu.memory_space<vmem>>, vector<2x256xf32>
    %c0_93 = arith.constant 0 : index
    %c0_94 = arith.constant 0 : index
    %123 = vector.load %arg3[%c0_93, %c0_94] : memref<256x256xf32, #tpu.memory_space<vmem>>, vector<256x256xf32>
    %cst_95 = arith.constant dense<0.000000e+00> : vector<2x256xf32>
    %124 = tpu.matmul %122, %123, %cst_95 {dimension_numbers = #tpu.dot_dimension_numbers<[1], [0], [0], [1], [0, 0, 1, 1], [], []>} : vector<2x256xf32>, vector<256x256xf32>, vector<2x256xf32> -> vector<2x256xf32>
    %125 = arith.index_cast %c5_i32 : i32 to index
    %c0_96 = arith.constant 0 : index
    %c0_97 = arith.constant 0 : index
    %126 = vector.load %arg10[%125, %c0_96, %c0_97] : memref<8x2x128xf32, #tpu.memory_space<vmem>>, vector<1x2x128xf32>
    %127 = vector.shape_cast %126 : vector<1x2x128xf32> to vector<2x128xf32>
    %128 = vector.extract_strided_slice %124 {offsets = [0, 0], sizes = [2, 128], strides = [1, 1]} : vector<2x256xf32> to vector<2x128xf32>
    %129 = arith.addf %127, %128 : vector<2x128xf32>
    %130 = math.tanh %129 : vector<2x128xf32>
    %c0_98 = arith.constant 0 : index
    %c0_99 = arith.constant 0 : index
    %131 = vector.load %arg4[%c0_98, %c0_99] : memref<128x128xf32, #tpu.memory_space<vmem>>, vector<128x128xf32>
    %cst_100 = arith.constant dense<0.000000e+00> : vector<2x128xf32>
    %132 = tpu.matmul %130, %131, %cst_100 {dimension_numbers = #tpu.dot_dimension_numbers<[1], [0], [0], [1], [0, 0, 1, 1], [], []>} : vector<2x128xf32>, vector<128x128xf32>, vector<2x128xf32> -> vector<2x128xf32>
    %133 = vector.extract_strided_slice %124 {offsets = [0, 128], sizes = [2, 128], strides = [1, 1]} : vector<2x256xf32> to vector<2x128xf32>
    %134 = arith.addf %132, %133 : vector<2x128xf32>
    %135 = arith.addf %134, %16 : vector<2x128xf32>
    %136 = math.tanh %135 : vector<2x128xf32>
    %c0_101 = arith.constant 0 : index
    %c0_102 = arith.constant 0 : index
    %137 = vector.load %arg9[%c0_101, %c0_102] : memref<2x256xf32, #tpu.memory_space<vmem>>, vector<2x128xf32>
    tpu.vector_store %arg9[%c0_101, %c0_102], %130 {strides = array<i32>} : memref<2x256xf32, #tpu.memory_space<vmem>>, vector<2x128xf32>,
    %c0_103 = arith.constant 0 : index
    %c128_104 = arith.constant 128 : index
    %138 = vector.load %arg9[%c0_103, %c128_104] : memref<2x256xf32, #tpu.memory_space<vmem>>, vector<2x128xf32>
    tpu.vector_store %arg9[%c0_103, %c128_104], %136 {strides = array<i32>} : memref<2x256xf32, #tpu.memory_space<vmem>>, vector<2x128xf32>,
    %139 = arith.index_cast %c5_i32 : i32 to index
    %c0_105 = arith.constant 0 : index
    %c0_106 = arith.constant 0 : index
    %140 = vector.load %arg7[%139, %c0_105, %c0_106] : memref<8x2x128xf32, #tpu.memory_space<vmem>>, vector<1x2x128xf32>
    %141 = vector.shape_cast %140 : vector<1x2x128xf32> to vector<2x128xf32>
    %142 = vector.shape_cast %136 : vector<2x128xf32> to vector<1x2x128xf32>
    tpu.vector_store %arg7[%139, %c0_105, %c0_106], %142 {strides = array<i32>} : memref<8x2x128xf32, #tpu.memory_space<vmem>>, vector<1x2x128xf32>,
    %c6_i32 = arith.constant 6 : i32
    %c0_107 = arith.constant 0 : index
    %c0_108 = arith.constant 0 : index
    %143 = vector.load %arg9[%c0_107, %c0_108] : memref<2x256xf32, #tpu.memory_space<vmem>>, vector<2x256xf32>
    %c0_109 = arith.constant 0 : index
    %c0_110 = arith.constant 0 : index
    %144 = vector.load %arg3[%c0_109, %c0_110] : memref<256x256xf32, #tpu.memory_space<vmem>>, vector<256x256xf32>
    %cst_111 = arith.constant dense<0.000000e+00> : vector<2x256xf32>
    %145 = tpu.matmul %143, %144, %cst_111 {dimension_numbers = #tpu.dot_dimension_numbers<[1], [0], [0], [1], [0, 0, 1, 1], [], []>} : vector<2x256xf32>, vector<256x256xf32>, vector<2x256xf32> -> vector<2x256xf32>
    %146 = arith.index_cast %c6_i32 : i32 to index
    %c0_112 = arith.constant 0 : index
    %c0_113 = arith.constant 0 : index
    %147 = vector.load %arg10[%146, %c0_112, %c0_113] : memref<8x2x128xf32, #tpu.memory_space<vmem>>, vector<1x2x128xf32>
    %148 = vector.shape_cast %147 : vector<1x2x128xf32> to vector<2x128xf32>
    %149 = vector.extract_strided_slice %145 {offsets = [0, 0], sizes = [2, 128], strides = [1, 1]} : vector<2x256xf32> to vector<2x128xf32>
    %150 = arith.addf %148, %149 : vector<2x128xf32>
    %151 = math.tanh %150 : vector<2x128xf32>
    %c0_114 = arith.constant 0 : index
    %c0_115 = arith.constant 0 : index
    %152 = vector.load %arg4[%c0_114, %c0_115] : memref<128x128xf32, #tpu.memory_space<vmem>>, vector<128x128xf32>
    %cst_116 = arith.constant dense<0.000000e+00> : vector<2x128xf32>
    %153 = tpu.matmul %151, %152, %cst_116 {dimension_numbers = #tpu.dot_dimension_numbers<[1], [0], [0], [1], [0, 0, 1, 1], [], []>} : vector<2x128xf32>, vector<128x128xf32>, vector<2x128xf32> -> vector<2x128xf32>
    %154 = vector.extract_strided_slice %145 {offsets = [0, 128], sizes = [2, 128], strides = [1, 1]} : vector<2x256xf32> to vector<2x128xf32>
    %155 = arith.addf %153, %154 : vector<2x128xf32>
    %156 = arith.addf %155, %16 : vector<2x128xf32>
    %157 = math.tanh %156 : vector<2x128xf32>
    %c0_117 = arith.constant 0 : index
    %c0_118 = arith.constant 0 : index
    %158 = vector.load %arg9[%c0_117, %c0_118] : memref<2x256xf32, #tpu.memory_space<vmem>>, vector<2x128xf32>
    tpu.vector_store %arg9[%c0_117, %c0_118], %151 {strides = array<i32>} : memref<2x256xf32, #tpu.memory_space<vmem>>, vector<2x128xf32>,
    %c0_119 = arith.constant 0 : index
    %c128_120 = arith.constant 128 : index
    %159 = vector.load %arg9[%c0_119, %c128_120] : memref<2x256xf32, #tpu.memory_space<vmem>>, vector<2x128xf32>
    tpu.vector_store %arg9[%c0_119, %c128_120], %157 {strides = array<i32>} : memref<2x256xf32, #tpu.memory_space<vmem>>, vector<2x128xf32>,
    %160 = arith.index_cast %c6_i32 : i32 to index
    %c0_121 = arith.constant 0 : index
    %c0_122 = arith.constant 0 : index
    %161 = vector.load %arg7[%160, %c0_121, %c0_122] : memref<8x2x128xf32, #tpu.memory_space<vmem>>, vector<1x2x128xf32>
    %162 = vector.shape_cast %161 : vector<1x2x128xf32> to vector<2x128xf32>
    %163 = vector.shape_cast %157 : vector<2x128xf32> to vector<1x2x128xf32>
    tpu.vector_store %arg7[%160, %c0_121, %c0_122], %163 {strides = array<i32>} : memref<8x2x128xf32, #tpu.memory_space<vmem>>, vector<1x2x128xf32>,
    %c7_i32 = arith.constant 7 : i32
    %c0_123 = arith.constant 0 : index
    %c0_124 = arith.constant 0 : index
    %164 = vector.load %arg9[%c0_123, %c0_124] : memref<2x256xf32, #tpu.memory_space<vmem>>, vector<2x256xf32>
    %c0_125 = arith.constant 0 : index
    %c0_126 = arith.constant 0 : index
    %165 = vector.load %arg3[%c0_125, %c0_126] : memref<256x256xf32, #tpu.memory_space<vmem>>, vector<256x256xf32>
    %cst_127 = arith.constant dense<0.000000e+00> : vector<2x256xf32>
    %166 = tpu.matmul %164, %165, %cst_127 {dimension_numbers = #tpu.dot_dimension_numbers<[1], [0], [0], [1], [0, 0, 1, 1], [], []>} : vector<2x256xf32>, vector<256x256xf32>, vector<2x256xf32> -> vector<2x256xf32>
    %167 = arith.index_cast %c7_i32 : i32 to index
    %c0_128 = arith.constant 0 : index
    %c0_129 = arith.constant 0 : index
    %168 = vector.load %arg10[%167, %c0_128, %c0_129] : memref<8x2x128xf32, #tpu.memory_space<vmem>>, vector<1x2x128xf32>
    %169 = vector.shape_cast %168 : vector<1x2x128xf32> to vector<2x128xf32>
    %170 = vector.extract_strided_slice %166 {offsets = [0, 0], sizes = [2, 128], strides = [1, 1]} : vector<2x256xf32> to vector<2x128xf32>
    %171 = arith.addf %169, %170 : vector<2x128xf32>
    %172 = math.tanh %171 : vector<2x128xf32>
    %c0_130 = arith.constant 0 : index
    %c0_131 = arith.constant 0 : index
    %173 = vector.load %arg4[%c0_130, %c0_131] : memref<128x128xf32, #tpu.memory_space<vmem>>, vector<128x128xf32>
    %cst_132 = arith.constant dense<0.000000e+00> : vector<2x128xf32>
    %174 = tpu.matmul %172, %173, %cst_132 {dimension_numbers = #tpu.dot_dimension_numbers<[1], [0], [0], [1], [0, 0, 1, 1], [], []>} : vector<2x128xf32>, vector<128x128xf32>, vector<2x128xf32> -> vector<2x128xf32>
    %175 = vector.extract_strided_slice %166 {offsets = [0, 128], sizes = [2, 128], strides = [1, 1]} : vector<2x256xf32> to vector<2x128xf32>
    %176 = arith.addf %174, %175 : vector<2x128xf32>
    %177 = arith.addf %176, %16 : vector<2x128xf32>
    %178 = math.tanh %177 : vector<2x128xf32>
    %c0_133 = arith.constant 0 : index
    %c0_134 = arith.constant 0 : index
    %179 = vector.load %arg9[%c0_133, %c0_134] : memref<2x256xf32, #tpu.memory_space<vmem>>, vector<2x128xf32>
    tpu.vector_store %arg9[%c0_133, %c0_134], %172 {strides = array<i32>} : memref<2x256xf32, #tpu.memory_space<vmem>>, vector<2x128xf32>,
    %c0_135 = arith.constant 0 : index
    %c128_136 = arith.constant 128 : index
    %180 = vector.load %arg9[%c0_135, %c128_136] : memref<2x256xf32, #tpu.memory_space<vmem>>, vector<2x128xf32>
    tpu.vector_store %arg9[%c0_135, %c128_136], %178 {strides = array<i32>} : memref<2x256xf32, #tpu.memory_space<vmem>>, vector<2x128xf32>,
    %181 = arith.index_cast %c7_i32 : i32 to index
    %c0_137 = arith.constant 0 : index
    %c0_138 = arith.constant 0 : index
    %182 = vector.load %arg7[%181, %c0_137, %c0_138] : memref<8x2x128xf32, #tpu.memory_space<vmem>>, vector<1x2x128xf32>
    %183 = vector.shape_cast %182 : vector<1x2x128xf32> to vector<2x128xf32>
    %184 = vector.shape_cast %178 : vector<2x128xf32> to vector<1x2x128xf32>
    tpu.vector_store %arg7[%181, %c0_137, %c0_138], %184 {strides = array<i32>} : memref<8x2x128xf32, #tpu.memory_space<vmem>>, vector<1x2x128xf32>,
    %c8_i32 = arith.constant 8 : i32
    %c0_i32_139 = arith.constant 0 : i32
    %185 = arith.cmpi eq, %arg0, %c0_i32_139 : i32
    %186 = arith.extui %185 : i1 to i32
    %c0_i32_140 = arith.constant 0 : i32
    %187 = arith.cmpi ne, %186, %c0_i32_140 : i32
    scf.if %187 {
      %c0_141 = arith.constant 0 : index
      %c0_142 = arith.constant 0 : index
      %188 = vector.load %arg9[%c0_141, %c0_142] : memref<2x256xf32, #tpu.memory_space<vmem>>, vector<2x128xf32>
      %c0_143 = arith.constant 0 : index
      %c0_144 = arith.constant 0 : index
      %c0_145 = arith.constant 0 : index
      %189 = vector.load %arg8[%c0_143, %c0_144, %c0_145] : memref<2x2x128xf32, #tpu.memory_space<vmem>>, vector<1x2x128xf32>
      %190 = vector.shape_cast %189 : vector<1x2x128xf32> to vector<2x128xf32>
      %191 = vector.shape_cast %188 : vector<2x128xf32> to vector<1x2x128xf32>
      tpu.vector_store %arg8[%c0_143, %c0_144, %c0_145], %191 {strides = array<i32>} : memref<2x2x128xf32, #tpu.memory_space<vmem>>, vector<1x2x128xf32>,
      %c0_146 = arith.constant 0 : index
      %c128_147 = arith.constant 128 : index
      %192 = vector.load %arg9[%c0_146, %c128_147] : memref<2x256xf32, #tpu.memory_space<vmem>>, vector<2x128xf32>
      %c1 = arith.constant 1 : index
      %c0_148 = arith.constant 0 : index
      %c0_149 = arith.constant 0 : index
      %193 = vector.load %arg8[%c1, %c0_148, %c0_149] : memref<2x2x128xf32, #tpu.memory_space<vmem>>, vector<1x2x128xf32>
      %194 = vector.shape_cast %193 : vector<1x2x128xf32> to vector<2x128xf32>
      %195 = vector.shape_cast %192 : vector<2x128xf32> to vector<1x2x128xf32>
      tpu.vector_store %arg8[%c1, %c0_148, %c0_149], %195 {strides = array<i32>} : memref<2x2x128xf32, #tpu.memory_space<vmem>>, vector<1x2x128xf32>,
    } else {
    }
    return
  }
  func.func @transform_0(%arg0: i32) -> (i32, i32, i32) {
    %c0_i32 = arith.constant 0 : i32
    %c0_i32_0 = arith.constant 0 : i32
    %c0_i32_1 = arith.constant 0 : i32
    return %arg0, %c0_i32, %c0_i32_0 : i32, i32, i32
  }
  func.func @transform_1(%arg0: i32) -> (i32, i32) {
    %c0_i32 = arith.constant 0 : i32
    %c0_i32_0 = arith.constant 0 : i32
    %c0_i32_1 = arith.constant 0 : i32
    return %c0_i32, %c0_i32_0 : i32, i32
  }
  func.func @transform_2(%arg0: i32) -> (i32, i32) {
    %c0_i32 = arith.constant 0 : i32
    %c0_i32_0 = arith.constant 0 : i32
    %c0_i32_1 = arith.constant 0 : i32
    return %c0_i32, %c0_i32_0 : i32, i32
  }
  func.func @transform_3(%arg0: i32) -> (i32, i32) {
    %c0_i32 = arith.constant 0 : i32
    %c0_i32_0 = arith.constant 0 : i32
    %c0_i32_1 = arith.constant 0 : i32
    return %c0_i32, %c0_i32_0 : i32, i32
  }
  func.func @transform_4(%arg0: i32) -> (i32, i32) {
    %c0_i32 = arith.constant 0 : i32
    %c0_i32_0 = arith.constant 0 : i32
    %c0_i32_1 = arith.constant 0 : i32
    return %c0_i32, %c0_i32_0 : i32, i32
  }
  func.func @transform_5(%arg0: i32) -> (i32, i32) {
    %c0_i32 = arith.constant 0 : i32
    %c0_i32_0 = arith.constant 0 : i32
    %c0_i32_1 = arith.constant 0 : i32
    return %c0_i32, %c0_i32_0 : i32, i32
  }
  func.func @transform_6(%arg0: i32) -> (i32, i32, i32) {
    %c0_i32 = arith.constant 0 : i32
    %c0_i32_0 = arith.constant 0 : i32
    %c0_i32_1 = arith.constant 0 : i32
    return %arg0, %c0_i32, %c0_i32_0 : i32, i32, i32
  }
  func.func @transform_7(%arg0: i32) -> (i32, i32, i32) {
    %c0_i32 = arith.constant 0 : i32
    %c0_i32_0 = arith.constant 0 : i32
    %c0_i32_1 = arith.constant 0 : i32
    %c0_i32_2 = arith.constant 0 : i32
    return %c0_i32, %c0_i32_0, %c0_i32_1 : i32, i32, i32
  }
}

</mosaic_0001>

<llo_original>
// kernel: rnn_forward.1
$region0: #{rnn_forward.1}
  #allocation0 [shape = 'u32[]', space=smem, size = 0x4, offset = 0x4, fixed_abs, tag = 'smem constant byte address 0x4 - core index']
  #allocation1 [shape = 'u32[72,128]{1,0:T(1,128)}', space=vmem, size = 0x9000, scoped, tag = 'internal scratch']
  #allocation2 [shape = 'f32[2,256]{1,0:T(2,128)}', space=vmem, size = 0x800, scoped, tag = 'scratch operand']
  #allocation3 [shape = 'f32[8,2,128]{2,1,0:T(2,128)}', space=vmem, size = 0x2000, scoped, tag = 'scratch operand']
  %s0 = inlined_call_operand.vmem [shape: f32[8,2,1], index: 0, kind: input, shape index: {}]
  %s1 = inlined_call_operand.vmem [shape: f32[1,128], index: 1, kind: input, shape index: {}]
  %s2 = inlined_call_operand.vmem [shape: f32[256,256], index: 2, kind: input, shape index: {}]
  %s3 = inlined_call_operand.vmem [shape: f32[128,128], index: 3, kind: input, shape index: {}]
  %s4 = inlined_call_operand.vmem [shape: f32[1,128], index: 4, kind: input, shape index: {}]
  %s5 = inlined_call_operand.vmem [shape: f32[1,128], index: 5, kind: input, shape index: {}]
  %s6 = inlined_call_operand.vmem [shape: f32[8,2,128], index: 6, kind: output, shape index: {0}]
  %s7 = inlined_call_operand.hbm [shape: f32[2,2,128], index: 7, kind: output, shape index: {1}]
  %8 = xla_tuple %s6, %s7
  %s9 = sld [smem:[#allocation0]]
  $region50: #{rnn_forward.1} parent=0
    _
  %s11 = ssub.s32 1, %s9
  %s12 = scalar_select 0, %s11, %s9
  $region1: #{rnn_forward.1} parent=0
    #allocation4 [shape = 'u8[2048]{0}', space=vmem, size = 0x800, scoped, tag = 'output window, operand 1, single buffered']
    #allocation5 [shape = 's32[1]{0}', space=sflag, size = 0x4, scoped, tag = 'scoped memory for rnn_forward.1']
    %13 = vsyncpa [#allocation5], 0
    // Predicated region
    $region2: #{rnn_forward.1} parent=1 // pred_check
      _
    $region3: #{rnn_forward.1} parent=1 // pred_check_branch
      %15 = sbr.rel (0) target = $region5
    $region4: #{rnn_forward.1} parent=1 // pred_region
      _
    $region5: #{rnn_forward.1} parent=1 // pred_fallthru
      _
    // Predicated region
    $region6: #{rnn_forward.1} parent=1 // pred_check
      _
    $region7: #{rnn_forward.1} parent=1 // pred_check_branch
      %17 = sbr.rel (0) target = $region9
    $region8: #{rnn_forward.1} parent=1 // pred_region
      _
    $region9: #{rnn_forward.1} parent=1 // pred_fallthru
      _
    // Predicated region
    $region10: #{rnn_forward.1} parent=1 // pred_check
      _
    $region11: #{rnn_forward.1} parent=1 // pred_check_branch
      %19 = sbr.rel (0) target = $region13
    $region12: #{rnn_forward.1} parent=1 // pred_region
      _
    $region13: #{rnn_forward.1} parent=1 // pred_fallthru
      _
    // Predicated region
    $region14: #{rnn_forward.1} parent=1 // pred_check
      _
    $region15: #{rnn_forward.1} parent=1 // pred_check_branch
      %21 = sbr.rel (0) target = $region17
    $region16: #{rnn_forward.1} parent=1 // pred_region
      _
    $region17: #{rnn_forward.1} parent=1 // pred_fallthru
      _
    // Predicated region
    $region18: #{rnn_forward.1} parent=1 // pred_check
      _
    $region19: #{rnn_forward.1} parent=1 // pred_check_branch
      %23 = sbr.rel (0) target = $region21
    $region20: #{rnn_forward.1} parent=1 // pred_region
      _
    $region21: #{rnn_forward.1} parent=1 // pred_fallthru
      _
    // Predicated region
    $region22: #{rnn_forward.1} parent=1 // pred_check
      _
    $region23: #{rnn_forward.1} parent=1 // pred_check_branch
      %25 = sbr.rel (0) target = $region25
    $region24: #{rnn_forward.1} parent=1 // pred_region
      _
    $region25: #{rnn_forward.1} parent=1 // pred_fallthru
      _
    %p26 = scmp.eq.s32.totalorder 0, 0
    // Predicated region
    $region26: #{rnn_forward.1} parent=1 // pred_check
      %p27 = pneg %p26
    $region27: #{rnn_forward.1} parent=1 // pred_check_branch
      %29 = sbr.rel (%p27) target = $region29
    $region28: #{rnn_forward.1} parent=1 // pred_region
      %30 = vst [vmem:[#allocation2] sm:$0xf] 0.0
    $region29: #{rnn_forward.1} parent=1 // pred_fallthru
      _
    %v31 = vld [vmem:[%s0] sm:$0x3]
    %v32 = vld [vmem:[%s0 + $0x2] sm:$0x3]
    %v33 = vld [vmem:[%s0 + $0x4] sm:$0x3]
    %v34 = vld [vmem:[%s0 + $0x6] sm:$0x3]
    %v35 = vld [vmem:[%s0 + $0x8] sm:$0x3]
    %v36 = vld [vmem:[%s0 + $0xa] sm:$0x3]
    %v37 = vld [vmem:[%s0 + $0xc] sm:$0x3]
    %v38 = vld [vmem:[%s0 + $0xe] sm:$0x3]
    %v39 = vld [vmem:[%s1] sm:$0x1]
    %41 = vset.pattern.permute.xlu0 0
    %42 = vperm.xlu0 %41, %v31
    %v43 = vpop.permute.xlu0 %42
    %46 = vset.pattern.permute.xlu0 0
    %47 = vperm.xlu0 %46, %v32
    %v48 = vpop.permute.xlu0 %47
    %51 = vset.pattern.permute.xlu0 0
    %52 = vperm.xlu0 %51, %v33
    %v53 = vpop.permute.xlu0 %52
    %56 = vset.pattern.permute.xlu0 0
    %57 = vperm.xlu0 %56, %v34
    %v58 = vpop.permute.xlu0 %57
    %61 = vset.pattern.permute.xlu0 0
    %62 = vperm.xlu0 %61, %v35
    %v63 = vpop.permute.xlu0 %62
    %66 = vset.pattern.permute.xlu0 0
    %67 = vperm.xlu0 %66, %v36
    %v68 = vpop.permute.xlu0 %67
    %71 = vset.pattern.permute.xlu0 0
    %72 = vperm.xlu0 %71, %v37
    %v73 = vpop.permute.xlu0 %72
    %76 = vset.pattern.permute.xlu0 0
    %77 = vperm.xlu0 %76, %v38
    %v78 = vpop.permute.xlu0 %77
    %v81 = vperm.slane %v39, 0
    %v83 = vmul.f32 %v43, %v81
    %v84 = vmul.f32 %v48, %v81
    %v85 = vmul.f32 %v53, %v81
    %v86 = vmul.f32 %v58, %v81
    %v87 = vmul.f32 %v63, %v81
    %v88 = vmul.f32 %v68, %v81
    %v89 = vmul.f32 %v73, %v81
    %v90 = vmul.f32 %v78, %v81
    %v91 = vld [vmem:[%s4] sm:$0x1]
    %v93 = vperm.slane %v91, 0
    %v95 = vadd.f32 %v83, %v93
    %v96 = vadd.f32 %v84, %v93
    %v97 = vadd.f32 %v85, %v93
    %v98 = vadd.f32 %v86, %v93
    %v99 = vadd.f32 %v87, %v93
    %v100 = vadd.f32 %v88, %v93
    %v101 = vadd.f32 %v89, %v93
    %v102 = vadd.f32 %v90, %v93
    %103 = vst [vmem:[#allocation3] sm:$0x3] %v95
    %104 = vst [vmem:[#allocation3 + $0x2] sm:$0x3] %v96
    %105 = vst [vmem:[#allocation3 + $0x4] sm:$0x3] %v97
    %106 = vst [vmem:[#allocation3 + $0x6] sm:$0x3] %v98
    %107 = vst [vmem:[#allocation3 + $0x8] sm:$0x3] %v99
    %108 = vst [vmem:[#allocation3 + $0xa] sm:$0x3] %v100
    %109 = vst [vmem:[#allocation3 + $0xc] sm:$0x3] %v101
    %110 = vst [vmem:[#allocation3 + $0xe] sm:$0x3] %v102
    %v111 = vld [vmem:[%s5] sm:$0x1]
    %v113 = vperm.slane %v111, 0
    %v115 = vld [vmem:[#allocation2] sm:$0xf]
    %v116 = vld [vmem:[%s2] sm:$0xff]
    %v117 = vld [vmem:[%s2 + $0x8] sm:$0xff]
    %v118 = vld [vmem:[%s2 + $0x10] sm:$0xff]
    %v119 = vld [vmem:[%s2 + $0x18] sm:$0xff]
    %v120 = vld [vmem:[%s2 + $0x20] sm:$0xff]
    %v121 = vld [vmem:[%s2 + $0x28] sm:$0xff]
    %v122 = vld [vmem:[%s2 + $0x30] sm:$0xff]
    %v123 = vld [vmem:[%s2 + $0x38] sm:$0xff]
    %v124 = vld [vmem:[%s2 + $0x40] sm:$0xff]
    %v125 = vld [vmem:[%s2 + $0x48] sm:$0xff]
    %v126 = vld [vmem:[%s2 + $0x50] sm:$0xff]
    %v127 = vld [vmem:[%s2 + $0x58] sm:$0xff]
    %v128 = vld [vmem:[%s2 + $0x60] sm:$0xff]
    %v129 = vld [vmem:[%s2 + $0x68] sm:$0xff]
    %v130 = vld [vmem:[%s2 + $0x70] sm:$0xff]
    %v131 = vld [vmem:[%s2 + $0x78] sm:$0xff]
    %v132 = vld [vmem:[%s2 + $0x80] sm:$0xff]
    %v133 = vld [vmem:[%s2 + $0x88] sm:$0xff]
    %v134 = vld [vmem:[%s2 + $0x90] sm:$0xff]
    %v135 = vld [vmem:[%s2 + $0x98] sm:$0xff]
    %v136 = vld [vmem:[%s2 + $0xa0] sm:$0xff]
    %v137 = vld [vmem:[%s2 + $0xa8] sm:$0xff]
    %v138 = vld [vmem:[%s2 + $0xb0] sm:$0xff]
    %v139 = vld [vmem:[%s2 + $0xb8] sm:$0xff]
    %v140 = vld [vmem:[%s2 + $0xc0] sm:$0xff]
    %v141 = vld [vmem:[%s2 + $0xc8] sm:$0xff]
    %v142 = vld [vmem:[%s2 + $0xd0] sm:$0xff]
    %v143 = vld [vmem:[%s2 + $0xd8] sm:$0xff]
    %v144 = vld [vmem:[%s2 + $0xe0] sm:$0xff]
    %v145 = vld [vmem:[%s2 + $0xe8] sm:$0xff]
    %v146 = vld [vmem:[%s2 + $0xf0] sm:$0xff]
    %v147 = vld [vmem:[%s2 + $0xf8] sm:$0xff]
    %v148 = vld [vmem:[%s2 + $0x100] sm:$0xff]
    %v149 = vld [vmem:[%s2 + $0x108] sm:$0xff]
    %v150 = vld [vmem:[%s2 + $0x110] sm:$0xff]
    %v151 = vld [vmem:[%s2 + $0x118] sm:$0xff]
    %v152 = vld [vmem:[%s2 + $0x120] sm:$0xff]
    %v153 = vld [vmem:[%s2 + $0x128] sm:$0xff]
    %v154 = vld [vmem:[%s2 + $0x130] sm:$0xff]
    %v155 = vld [vmem:[%s2 + $0x138] sm:$0xff]
    %v156 = vld [vmem:[%s2 + $0x140] sm:$0xff]
    %v157 = vld [vmem:[%s2 + $0x148] sm:$0xff]
    %v158 = vld [vmem:[%s2 + $0x150] sm:$0xff]
    %v159 = vld [vmem:[%s2 + $0x158] sm:$0xff]
    %v160 = vld [vmem:[%s2 + $0x160] sm:$0xff]
    %v161 = vld [vmem:[%s2 + $0x168] sm:$0xff]
    %v162 = vld [vmem:[%s2 + $0x170] sm:$0xff]
    %v163 = vld [vmem:[%s2 + $0x178] sm:$0xff]
    %v164 = vld [vmem:[%s2 + $0x180] sm:$0xff]
    %v165 = vld [vmem:[%s2 + $0x188] sm:$0xff]
    %v166 = vld [vmem:[%s2 + $0x190] sm:$0xff]
    %v167 = vld [vmem:[%s2 + $0x198] sm:$0xff]
    %v168 = vld [vmem:[%s2 + $0x1a0] sm:$0xff]
    %v169 = vld [vmem:[%s2 + $0x1a8] sm:$0xff]
    %v170 = vld [vmem:[%s2 + $0x1b0] sm:$0xff]
    %v171 = vld [vmem:[%s2 + $0x1b8] sm:$0xff]
    %v172 = vld [vmem:[%s2 + $0x1c0] sm:$0xff]
    %v173 = vld [vmem:[%s2 + $0x1c8] sm:$0xff]
    %v174 = vld [vmem:[%s2 + $0x1d0] sm:$0xff]
    %v175 = vld [vmem:[%s2 + $0x1d8] sm:$0xff]
    %v176 = vld [vmem:[%s2 + $0x1e0] sm:$0xff]
    %v177 = vld [vmem:[%s2 + $0x1e8] sm:$0xff]
    %v178 = vld [vmem:[%s2 + $0x1f0] sm:$0xff]
    %v179 = vld [vmem:[%s2 + $0x1f8] sm:$0xff]
    %181 = vst [vmem:[#allocation1] ss:$4 sm:$0xff] %v115
    %v182 = vld.sshfl [vmem:[#allocation1] sm:$0xff pattern:$0x73625140]
    %v183 = vld.sshfl [vmem:[#allocation1 + $0x8] sm:$0xff pattern:$0x73625140]
    %186 = vmatpush.msra.mxu0 %v146
    %187 = vmatpush.msra.mxu0 %v144
    %188 = vmatpush.msra.mxu0 %v142
    %189 = vmatpush.msra.mxu0 %v140
    %190 = vmatpush.msra.mxu0 %v138
    %191 = vmatpush.msra.mxu0 %v136
    %192 = vmatpush.msra.mxu0 %v134
    %193 = vmatpush.msra.mxu0 %v132
    %194 = vmatpush.msra.mxu0 %v130
    %195 = vmatpush.msra.mxu0 %v128
    %196 = vmatpush.msra.mxu0 %v126
    %197 = vmatpush.msra.mxu0 %v124
    %198 = vmatpush.msra.mxu0 %v122
    %199 = vmatpush.msra.mxu0 %v120
    %200 = vmatpush.msra.mxu0 %v118
    %201 = vmatpush.msra.mxu0 %v116
    %202 = vmatmul.f32.gmra.mxu0 %v182
    %v203 = vpop.f32.mrf.mxu0
    %v204 = vadd.f32 0.0, %v203
    %205 = vdwg.mxu0
    %206 = vmatpush.msra.mxu0 %v178
    %207 = vmatpush.msra.mxu0 %v176
    %208 = vmatpush.msra.mxu0 %v174
    %209 = vmatpush.msra.mxu0 %v172
    %210 = vmatpush.msra.mxu0 %v170
    %211 = vmatpush.msra.mxu0 %v168
    %212 = vmatpush.msra.mxu0 %v166
    %213 = vmatpush.msra.mxu0 %v164
    %214 = vmatpush.msra.mxu0 %v162
    %215 = vmatpush.msra.mxu0 %v160
    %216 = vmatpush.msra.mxu0 %v158
    %217 = vmatpush.msra.mxu0 %v156
    %218 = vmatpush.msra.mxu0 %v154
    %219 = vmatpush.msra.mxu0 %v152
    %220 = vmatpush.msra.mxu0 %v150
    %221 = vmatpush.msra.mxu0 %v148
    %222 = vmatmul.f32.gmra.mxu0 %v183
    %v223 = vpop.f32.mrf.mxu0
    %v224 = vadd.f32 %v204, %v223
    %225 = vdwg.mxu0
    %226 = vmatpush.msra.mxu0 %v147
    %227 = vmatpush.msra.mxu0 %v145
    %228 = vmatpush.msra.mxu0 %v143
    %229 = vmatpush.msra.mxu0 %v141
    %230 = vmatpush.msra.mxu0 %v139
    %231 = vmatpush.msra.mxu0 %v137
    %232 = vmatpush.msra.mxu0 %v135
    %233 = vmatpush.msra.mxu0 %v133
    %234 = vmatpush.msra.mxu0 %v131
    %235 = vmatpush.msra.mxu0 %v129
    %236 = vmatpush.msra.mxu0 %v127
    %237 = vmatpush.msra.mxu0 %v125
    %238 = vmatpush.msra.mxu0 %v123
    %239 = vmatpush.msra.mxu0 %v121
    %240 = vmatpush.msra.mxu0 %v119
    %241 = vmatpush.msra.mxu0 %v117
    %242 = vmatmul.f32.gmra.mxu0 %v182
    %v243 = vpop.f32.mrf.mxu0
    %v244 = vadd.f32 0.0, %v243
    %245 = vdwg.mxu0
    %246 = vmatpush.msra.mxu0 %v179
    %247 = vmatpush.msra.mxu0 %v177
    %248 = vmatpush.msra.mxu0 %v175
    %249 = vmatpush.msra.mxu0 %v173
    %250 = vmatpush.msra.mxu0 %v171
    %251 = vmatpush.msra.mxu0 %v169
    %252 = vmatpush.msra.mxu0 %v167
    %253 = vmatpush.msra.mxu0 %v165
    %254 = vmatpush.msra.mxu0 %v163
    %255 = vmatpush.msra.mxu0 %v161
    %256 = vmatpush.msra.mxu0 %v159
    %257 = vmatpush.msra.mxu0 %v157
    %258 = vmatpush.msra.mxu0 %v155
    %259 = vmatpush.msra.mxu0 %v153
    %260 = vmatpush.msra.mxu0 %v151
    %261 = vmatpush.msra.mxu0 %v149
    %262 = vmatmul.f32.gmra.mxu0 %v183
    %v263 = vpop.f32.mrf.mxu0
    %v264 = vadd.f32 %v244, %v263
    %265 = vdwg.mxu0
    %v266 = vld [vmem:[#allocation3] sm:$0x3]
    %v267 = vadd.f32 %v266, %v224
    %v268 = vtanh.pop %v267
    %v269 = vld [vmem:[%s3] sm:$0xff]
    %v270 = vld [vmem:[%s3 + $0x8] sm:$0xff]
    %v271 = vld [vmem:[%s3 + $0x10] sm:$0xff]
    %v272 = vld [vmem:[%s3 + $0x18] sm:$0xff]
    %v273 = vld [vmem:[%s3 + $0x20] sm:$0xff]
    %v274 = vld [vmem:[%s3 + $0x28] sm:$0xff]
    %v275 = vld [vmem:[%s3 + $0x30] sm:$0xff]
    %v276 = vld [vmem:[%s3 + $0x38] sm:$0xff]
    %v277 = vld [vmem:[%s3 + $0x40] sm:$0xff]
    %v278 = vld [vmem:[%s3 + $0x48] sm:$0xff]
    %v279 = vld [vmem:[%s3 + $0x50] sm:$0xff]
    %v280 = vld [vmem:[%s3 + $0x58] sm:$0xff]
    %v281 = vld [vmem:[%s3 + $0x60] sm:$0xff]
    %v282 = vld [vmem:[%s3 + $0x68] sm:$0xff]
    %v283 = vld [vmem:[%s3 + $0x70] sm:$0xff]
    %v284 = vld [vmem:[%s3 + $0x78] sm:$0xff]
    %285 = vmatpush.msra.mxu0 %v284
    %286 = vmatpush.msra.mxu0 %v283
    %287 = vmatpush.msra.mxu0 %v282
    %288 = vmatpush.msra.mxu0 %v281
    %289 = vmatpush.msra.mxu0 %v280
    %290 = vmatpush.msra.mxu0 %v279
    %291 = vmatpush.msra.mxu0 %v278
    %292 = vmatpush.msra.mxu0 %v277
    %293 = vmatpush.msra.mxu0 %v276
    %294 = vmatpush.msra.mxu0 %v275
    %295 = vmatpush.msra.mxu0 %v274
    %296 = vmatpush.msra.mxu0 %v273
    %297 = vmatpush.msra.mxu0 %v272
    %298 = vmatpush.msra.mxu0 %v271
    %299 = vmatpush.msra.mxu0 %v270
    %300 = vmatpush.msra.mxu0 %v269
    %301 = vmatmul.f32.gmra.mxu0 %v268
    %v302 = vpop.f32.mrf.mxu0
    %v303 = vadd.f32 %v264, %v302
    %304 = vdwg.mxu0
    %v305 = vadd.f32 %v303, %v113
    %v306 = vtanh.pop %v305
    %307 = vst [vmem:[#allocation2] sm:$0x3] %v268
    %308 = vst [vmem:[#allocation2 + $0x2] sm:$0x3] %v306
    %309 = vst [vmem:[%s6] sm:$0x3] %v306
    %v310 = vld [vmem:[#allocation2] sm:$0xf]
    %v311 = vld [vmem:[%s2] sm:$0xff]
    %v312 = vld [vmem:[%s2 + $0x8] sm:$0xff]
    %v313 = vld [vmem:[%s2 + $0x10] sm:$0xff]
    %v314 = vld [vmem:[%s2 + $0x18] sm:$0xff]
    %v315 = vld [vmem:[%s2 + $0x20] sm:$0xff]
    %v316 = vld [vmem:[%s2 + $0x28] sm:$0xff]
    %v317 = vld [vmem:[%s2 + $0x30] sm:$0xff]
    %v318 = vld [vmem:[%s2 + $0x38] sm:$0xff]
    %v319 = vld [vmem:[%s2 + $0x40] sm:$0xff]
    %v320 = vld [vmem:[%s2 + $0x48] sm:$0xff]
    %v321 = vld [vmem:[%s2 + $0x50] sm:$0xff]
    %v322 = vld [vmem:[%s2 + $0x58] sm:$0xff]
    %v323 = vld [vmem:[%s2 + $0x60] sm:$0xff]
    %v324 = vld [vmem:[%s2 + $0x68] sm:$0xff]
    %v325 = vld [vmem:[%s2 + $0x70] sm:$0xff]
    %v326 = vld [vmem:[%s2 + $0x78] sm:$0xff]
    %v327 = vld [vmem:[%s2 + $0x80] sm:$0xff]
    %v328 = vld [vmem:[%s2 + $0x88] sm:$0xff]
    %v329 = vld [vmem:[%s2 + $0x90] sm:$0xff]
    %v330 = vld [vmem:[%s2 + $0x98] sm:$0xff]
    %v331 = vld [vmem:[%s2 + $0xa0] sm:$0xff]
    %v332 = vld [vmem:[%s2 + $0xa8] sm:$0xff]
    %v333 = vld [vmem:[%s2 + $0xb0] sm:$0xff]
    %v334 = vld [vmem:[%s2 + $0xb8] sm:$0xff]
    %v335 = vld [vmem:[%s2 + $0xc0] sm:$0xff]
    %v336 = vld [vmem:[%s2 + $0xc8] sm:$0xff]
    %v337 = vld [vmem:[%s2 + $0xd0] sm:$0xff]
    %v338 = vld [vmem:[%s2 + $0xd8] sm:$0xff]
    %v339 = vld [vmem:[%s2 + $0xe0] sm:$0xff]
    %v340 = vld [vmem:[%s2 + $0xe8] sm:$0xff]
    %v341 = vld [vmem:[%s2 + $0xf0] sm:$0xff]
    %v342 = vld [vmem:[%s2 + $0xf8] sm:$0xff]
    %v343 = vld [vmem:[%s2 + $0x100] sm:$0xff]
    %v344 = vld [vmem:[%s2 + $0x108] sm:$0xff]
    %v345 = vld [vmem:[%s2 + $0x110] sm:$0xff]
    %v346 = vld [vmem:[%s2 + $0x118] sm:$0xff]
    %v347 = vld [vmem:[%s2 + $0x120] sm:$0xff]
    %v348 = vld [vmem:[%s2 + $0x128] sm:$0xff]
    %v349 = vld [vmem:[%s2 + $0x130] sm:$0xff]
    %v350 = vld [vmem:[%s2 + $0x138] sm:$0xff]
    %v351 = vld [vmem:[%s2 + $0x140] sm:$0xff]
    %v352 = vld [vmem:[%s2 + $0x148] sm:$0xff]
    %v353 = vld [vmem:[%s2 + $0x150] sm:$0xff]
    %v354 = vld [vmem:[%s2 + $0x158] sm:$0xff]
    %v355 = vld [vmem:[%s2 + $0x160] sm:$0xff]
    %v356 = vld [vmem:[%s2 + $0x168] sm:$0xff]
    %v357 = vld [vmem:[%s2 + $0x170] sm:$0xff]
    %v358 = vld [vmem:[%s2 + $0x178] sm:$0xff]
    %v359 = vld [vmem:[%s2 + $0x180] sm:$0xff]
    %v360 = vld [vmem:[%s2 + $0x188] sm:$0xff]
    %v361 = vld [vmem:[%s2 + $0x190] sm:$0xff]
    %v362 = vld [vmem:[%s2 + $0x198] sm:$0xff]
    %v363 = vld [vmem:[%s2 + $0x1a0] sm:$0xff]
    %v364 = vld [vmem:[%s2 + $0x1a8] sm:$0xff]
    %v365 = vld [vmem:[%s2 + $0x1b0] sm:$0xff]
    %v366 = vld [vmem:[%s2 + $0x1b8] sm:$0xff]
    %v367 = vld [vmem:[%s2 + $0x1c0] sm:$0xff]
    %v368 = vld [vmem:[%s2 + $0x1c8] sm:$0xff]
    %v369 = vld [vmem:[%s2 + $0x1d0] sm:$0xff]
    %v370 = vld [vmem:[%s2 + $0x1d8] sm:$0xff]
    %v371 = vld [vmem:[%s2 + $0x1e0] sm:$0xff]
    %v372 = vld [vmem:[%s2 + $0x1e8] sm:$0xff]
    %v373 = vld [vmem:[%s2 + $0x1f0] sm:$0xff]
    %v374 = vld [vmem:[%s2 + $0x1f8] sm:$0xff]
    %376 = vst [vmem:[#allocation1] ss:$4 sm:$0xff] %v310
    %v377 = vld.sshfl [vmem:[#allocation1] sm:$0xff pattern:$0x73625140]
    %v378 = vld.sshfl [vmem:[#allocation1 + $0x8] sm:$0xff pattern:$0x73625140]
    %381 = vmatpush.msra.mxu0 %v341
    %382 = vmatpush.msra.mxu0 %v339
    %383 = vmatpush.msra.mxu0 %v337
    %384 = vmatpush.msra.mxu0 %v335
    %385 = vmatpush.msra.mxu0 %v333
    %386 = vmatpush.msra.mxu0 %v331
    %387 = vmatpush.msra.mxu0 %v329
    %388 = vmatpush.msra.mxu0 %v327
    %389 = vmatpush.msra.mxu0 %v325
    %390 = vmatpush.msra.mxu0 %v323
    %391 = vmatpush.msra.mxu0 %v321
    %392 = vmatpush.msra.mxu0 %v319
    %393 = vmatpush.msra.mxu0 %v317
    %394 = vmatpush.msra.mxu0 %v315
    %395 = vmatpush.msra.mxu0 %v313
    %396 = vmatpush.msra.mxu0 %v311
    %397 = vmatmul.f32.gmra.mxu0 %v377
    %v398 = vpop.f32.mrf.mxu0
    %v399 = vadd.f32 0.0, %v398
    %400 = vdwg.mxu0
    %401 = vmatpush.msra.mxu0 %v373
    %402 = vmatpush.msra.mxu0 %v371
    %403 = vmatpush.msra.mxu0 %v369
    %404 = vmatpush.msra.mxu0 %v367
    %405 = vmatpush.msra.mxu0 %v365
    %406 = vmatpush.msra.mxu0 %v363
    %407 = vmatpush.msra.mxu0 %v361
    %408 = vmatpush.msra.mxu0 %v359
    %409 = vmatpush.msra.mxu0 %v357
    %410 = vmatpush.msra.mxu0 %v355
    %411 = vmatpush.msra.mxu0 %v353
    %412 = vmatpush.msra.mxu0 %v351
    %413 = vmatpush.msra.mxu0 %v349
    %414 = vmatpush.msra.mxu0 %v347
    %415 = vmatpush.msra.mxu0 %v345
    %416 = vmatpush.msra.mxu0 %v343
    %417 = vmatmul.f32.gmra.mxu0 %v378
    %v418 = vpop.f32.mrf.mxu0
    %v419 = vadd.f32 %v399, %v418
    %420 = vdwg.mxu0
    %421 = vmatpush.msra.mxu0 %v342
    %422 = vmatpush.msra.mxu0 %v340
    %423 = vmatpush.msra.mxu0 %v338
    %424 = vmatpush.msra.mxu0 %v336
    %425 = vmatpush.msra.mxu0 %v334
    %426 = vmatpush.msra.mxu0 %v332
    %427 = vmatpush.msra.mxu0 %v330
    %428 = vmatpush.msra.mxu0 %v328
    %429 = vmatpush.msra.mxu0 %v326
    %430 = vmatpush.msra.mxu0 %v324
    %431 = vmatpush.msra.mxu0 %v322
    %432 = vmatpush.msra.mxu0 %v320
    %433 = vmatpush.msra.mxu0 %v318
    %434 = vmatpush.msra.mxu0 %v316
    %435 = vmatpush.msra.mxu0 %v314
    %436 = vmatpush.msra.mxu0 %v312
    %437 = vmatmul.f32.gmra.mxu0 %v377
    %v438 = vpop.f32.mrf.mxu0
    %v439 = vadd.f32 0.0, %v438
    %440 = vdwg.mxu0
    %441 = vmatpush.msra.mxu0 %v374
    %442 = vmatpush.msra.mxu0 %v372
    %443 = vmatpush.msra.mxu0 %v370
    %444 = vmatpush.msra.mxu0 %v368
    %445 = vmatpush.msra.mxu0 %v366
    %446 = vmatpush.msra.mxu0 %v364
    %447 = vmatpush.msra.mxu0 %v362
    %448 = vmatpush.msra.mxu0 %v360
    %449 = vmatpush.msra.mxu0 %v358
    %450 = vmatpush.msra.mxu0 %v356
    %451 = vmatpush.msra.mxu0 %v354
    %452 = vmatpush.msra.mxu0 %v352
    %453 = vmatpush.msra.mxu0 %v350
    %454 = vmatpush.msra.mxu0 %v348
    %455 = vmatpush.msra.mxu0 %v346
    %456 = vmatpush.msra.mxu0 %v344
    %457 = vmatmul.f32.gmra.mxu0 %v378
    %v458 = vpop.f32.mrf.mxu0
    %v459 = vadd.f32 %v439, %v458
    %460 = vdwg.mxu0
    %s461 = scalar_lea.vmem [#allocation3], 2
    %v462 = vld [vmem:[%s461] sm:$0x3]
    %v463 = vadd.f32 %v462, %v419
    %v464 = vtanh.pop %v463
    %v465 = vld [vmem:[%s3] sm:$0xff]
    %v466 = vld [vmem:[%s3 + $0x8] sm:$0xff]
    %v467 = vld [vmem:[%s3 + $0x10] sm:$0xff]
    %v468 = vld [vmem:[%s3 + $0x18] sm:$0xff]
    %v469 = vld [vmem:[%s3 + $0x20] sm:$0xff]
    %v470 = vld [vmem:[%s3 + $0x28] sm:$0xff]
    %v471 = vld [vmem:[%s3 + $0x30] sm:$0xff]
    %v472 = vld [vmem:[%s3 + $0x38] sm:$0xff]
    %v473 = vld [vmem:[%s3 + $0x40] sm:$0xff]
    %v474 = vld [vmem:[%s3 + $0x48] sm:$0xff]
    %v475 = vld [vmem:[%s3 + $0x50] sm:$0xff]
    %v476 = vld [vmem:[%s3 + $0x58] sm:$0xff]
    %v477 = vld [vmem:[%s3 + $0x60] sm:$0xff]
    %v478 = vld [vmem:[%s3 + $0x68] sm:$0xff]
    %v479 = vld [vmem:[%s3 + $0x70] sm:$0xff]
    %v480 = vld [vmem:[%s3 + $0x78] sm:$0xff]
    %481 = vmatpush.msra.mxu0 %v480
    %482 = vmatpush.msra.mxu0 %v479
    %483 = vmatpush.msra.mxu0 %v478
    %484 = vmatpush.msra.mxu0 %v477
    %485 = vmatpush.msra.mxu0 %v476
    %486 = vmatpush.msra.mxu0 %v475
    %487 = vmatpush.msra.mxu0 %v474
    %488 = vmatpush.msra.mxu0 %v473
    %489 = vmatpush.msra.mxu0 %v472
    %490 = vmatpush.msra.mxu0 %v471
    %491 = vmatpush.msra.mxu0 %v470
    %492 = vmatpush.msra.mxu0 %v469
    %493 = vmatpush.msra.mxu0 %v468
    %494 = vmatpush.msra.mxu0 %v467
    %495 = vmatpush.msra.mxu0 %v466
    %496 = vmatpush.msra.mxu0 %v465
    %497 = vmatmul.f32.gmra.mxu0 %v464
    %v498 = vpop.f32.mrf.mxu0
    %v499 = vadd.f32 %v459, %v498
    %500 = vdwg.mxu0
    %v501 = vadd.f32 %v499, %v113
    %v502 = vtanh.pop %v501
    %503 = vst [vmem:[#allocation2] sm:$0x3] %v464
    %504 = vst [vmem:[#allocation2 + $0x2] sm:$0x3] %v502
    %s505 = scalar_lea.vmem %s6, 2
    %506 = vst [vmem:[%s505] sm:$0x3] %v502
    %v507 = vld [vmem:[#allocation2] sm:$0xf]
    %v508 = vld [vmem:[%s2] sm:$0xff]
    %v509 = vld [vmem:[%s2 + $0x8] sm:$0xff]
    %v510 = vld [vmem:[%s2 + $0x10] sm:$0xff]
    %v511 = vld [vmem:[%s2 + $0x18] sm:$0xff]
    %v512 = vld [vmem:[%s2 + $0x20] sm:$0xff]
    %v513 = vld [vmem:[%s2 + $0x28] sm:$0xff]
    %v514 = vld [vmem:[%s2 + $0x30] sm:$0xff]
    %v515 = vld [vmem:[%s2 + $0x38] sm:$0xff]
    %v516 = vld [vmem:[%s2 + $0x40] sm:$0xff]
    %v517 = vld [vmem:[%s2 + $0x48] sm:$0xff]
    %v518 = vld [vmem:[%s2 + $0x50] sm:$0xff]
    %v519 = vld [vmem:[%s2 + $0x58] sm:$0xff]
    %v520 = vld [vmem:[%s2 + $0x60] sm:$0xff]
    %v521 = vld [vmem:[%s2 + $0x68] sm:$0xff]
    %v522 = vld [vmem:[%s2 + $0x70] sm:$0xff]
    %v523 = vld [vmem:[%s2 + $0x78] sm:$0xff]
    %v524 = vld [vmem:[%s2 + $0x80] sm:$0xff]
    %v525 = vld [vmem:[%s2 + $0x88] sm:$0xff]
    %v526 = vld [vmem:[%s2 + $0x90] sm:$0xff]
    %v527 = vld [vmem:[%s2 + $0x98] sm:$0xff]
    %v528 = vld [vmem:[%s2 + $0xa0] sm:$0xff]
    %v529 = vld [vmem:[%s2 + $0xa8] sm:$0xff]
    %v530 = vld [vmem:[%s2 + $0xb0] sm:$0xff]
    %v531 = vld [vmem:[%s2 + $0xb8] sm:$0xff]
    %v532 = vld [vmem:[%s2 + $0xc0] sm:$0xff]
    %v533 = vld [vmem:[%s2 + $0xc8] sm:$0xff]
    %v534 = vld [vmem:[%s2 + $0xd0] sm:$0xff]
    %v535 = vld [vmem:[%s2 + $0xd8] sm:$0xff]
    %v536 = vld [vmem:[%s2 + $0xe0] sm:$0xff]
    %v537 = vld [vmem:[%s2 + $0xe8] sm:$0xff]
    %v538 = vld [vmem:[%s2 + $0xf0] sm:$0xff]
    %v539 = vld [vmem:[%s2 + $0xf8] sm:$0xff]
    %v540 = vld [vmem:[%s2 + $0x100] sm:$0xff]
    %v541 = vld [vmem:[%s2 + $0x108] sm:$0xff]
    %v542 = vld [vmem:[%s2 + $0x110] sm:$0xff]
    %v543 = vld [vmem:[%s2 + $0x118] sm:$0xff]
    %v544 = vld [vmem:[%s2 + $0x120] sm:$0xff]
    %v545 = vld [vmem:[%s2 + $0x128] sm:$0xff]
    %v546 = vld [vmem:[%s2 + $0x130] sm:$0xff]
    %v547 = vld [vmem:[%s2 + $0x138] sm:$0xff]
    %v548 = vld [vmem:[%s2 + $0x140] sm:$0xff]
    %v549 = vld [vmem:[%s2 + $0x148] sm:$0xff]
    %v550 = vld [vmem:[%s2 + $0x150] sm:$0xff]
    %v551 = vld [vmem:[%s2 + $0x158] sm:$0xff]
    %v552 = vld [vmem:[%s2 + $0x160] sm:$0xff]
    %v553 = vld [vmem:[%s2 + $0x168] sm:$0xff]
    %v554 = vld [vmem:[%s2 + $0x170] sm:$0xff]
    %v555 = vld [vmem:[%s2 + $0x178] sm:$0xff]
    %v556 = vld [vmem:[%s2 + $0x180] sm:$0xff]
    %v557 = vld [vmem:[%s2 + $0x188] sm:$0xff]
    %v558 = vld [vmem:[%s2 + $0x190] sm:$0xff]
    %v559 = vld [vmem:[%s2 + $0x198] sm:$0xff]
    %v560 = vld [vmem:[%s2 + $0x1a0] sm:$0xff]
    %v561 = vld [vmem:[%s2 + $0x1a8] sm:$0xff]
    %v562 = vld [vmem:[%s2 + $0x1b0] sm:$0xff]
    %v563 = vld [vmem:[%s2 + $0x1b8] sm:$0xff]
    %v564 = vld [vmem:[%s2 + $0x1c0] sm:$0xff]
    %v565 = vld [vmem:[%s2 + $0x1c8] sm:$0xff]
    %v566 = vld [vmem:[%s2 + $0x1d0] sm:$0xff]
    %v567 = vld [vmem:[%s2 + $0x1d8] sm:$0xff]
    %v568 = vld [vmem:[%s2 + $0x1e0] sm:$0xff]
    %v569 = vld [vmem:[%s2 + $0x1e8] sm:$0xff]
    %v570 = vld [vmem:[%s2 + $0x1f0] sm:$0xff]
    %v571 = vld [vmem:[%s2 + $0x1f8] sm:$0xff]
    %573 = vst [vmem:[#allocation1] ss:$4 sm:$0xff] %v507
    %v574 = vld.sshfl [vmem:[#allocation1] sm:$0xff pattern:$0x73625140]
    %v575 = vld.sshfl [vmem:[#allocation1 + $0x8] sm:$0xff pattern:$0x73625140]
    %578 = vmatpush.msra.mxu0 %v538
    %579 = vmatpush.msra.mxu0 %v536
    %580 = vmatpush.msra.mxu0 %v534
    %581 = vmatpush.msra.mxu0 %v532
    %582 = vmatpush.msra.mxu0 %v530
    %583 = vmatpush.msra.mxu0 %v528
    %584 = vmatpush.msra.mxu0 %v526
    %585 = vmatpush.msra.mxu0 %v524
    %586 = vmatpush.msra.mxu0 %v522
    %587 = vmatpush.msra.mxu0 %v520
    %588 = vmatpush.msra.mxu0 %v518
    %589 = vmatpush.msra.mxu0 %v516
    %590 = vmatpush.msra.mxu0 %v514
    %591 = vmatpush.msra.mxu0 %v512
    %592 = vmatpush.msra.mxu0 %v510
    %593 = vmatpush.msra.mxu0 %v508
    %594 = vmatmul.f32.gmra.mxu0 %v574
    %v595 = vpop.f32.mrf.mxu0
    %v596 = vadd.f32 0.0, %v595
    %597 = vdwg.mxu0
    %598 = vmatpush.msra.mxu0 %v570
    %599 = vmatpush.msra.mxu0 %v568
    %600 = vmatpush.msra.mxu0 %v566
    %601 = vmatpush.msra.mxu0 %v564
    %602 = vmatpush.msra.mxu0 %v562
    %603 = vmatpush.msra.mxu0 %v560
    %604 = vmatpush.msra.mxu0 %v558
    %605 = vmatpush.msra.mxu0 %v556
    %606 = vmatpush.msra.mxu0 %v554
    %607 = vmatpush.msra.mxu0 %v552
    %608 = vmatpush.msra.mxu0 %v550
    %609 = vmatpush.msra.mxu0 %v548
    %610 = vmatpush.msra.mxu0 %v546
    %611 = vmatpush.msra.mxu0 %v544
    %612 = vmatpush.msra.mxu0 %v542
    %613 = vmatpush.msra.mxu0 %v540
    %614 = vmatmul.f32.gmra.mxu0 %v575
    %v615 = vpop.f32.mrf.mxu0
    %v616 = vadd.f32 %v596, %v615
    %617 = vdwg.mxu0
    %618 = vmatpush.msra.mxu0 %v539
    %619 = vmatpush.msra.mxu0 %v537
    %620 = vmatpush.msra.mxu0 %v535
    %621 = vmatpush.msra.mxu0 %v533
    %622 = vmatpush.msra.mxu0 %v531
    %623 = vmatpush.msra.mxu0 %v529
    %624 = vmatpush.msra.mxu0 %v527
    %625 = vmatpush.msra.mxu0 %v525
    %626 = vmatpush.msra.mxu0 %v523
    %627 = vmatpush.msra.mxu0 %v521
    %628 = vmatpush.msra.mxu0 %v519
    %629 = vmatpush.msra.mxu0 %v517
    %630 = vmatpush.msra.mxu0 %v515
    %631 = vmatpush.msra.mxu0 %v513
    %632 = vmatpush.msra.mxu0 %v511
    %633 = vmatpush.msra.mxu0 %v509
    %634 = vmatmul.f32.gmra.mxu0 %v574
    %v635 = vpop.f32.mrf.mxu0
    %v636 = vadd.f32 0.0, %v635
    %637 = vdwg.mxu0
    %638 = vmatpush.msra.mxu0 %v571
    %639 = vmatpush.msra.mxu0 %v569
    %640 = vmatpush.msra.mxu0 %v567
    %641 = vmatpush.msra.mxu0 %v565
    %642 = vmatpush.msra.mxu0 %v563
    %643 = vmatpush.msra.mxu0 %v561
    %644 = vmatpush.msra.mxu0 %v559
    %645 = vmatpush.msra.mxu0 %v557
    %646 = vmatpush.msra.mxu0 %v555
    %647 = vmatpush.msra.mxu0 %v553
    %648 = vmatpush.msra.mxu0 %v551
    %649 = vmatpush.msra.mxu0 %v549
    %650 = vmatpush.msra.mxu0 %v547
    %651 = vmatpush.msra.mxu0 %v545
    %652 = vmatpush.msra.mxu0 %v543
    %653 = vmatpush.msra.mxu0 %v541
    %654 = vmatmul.f32.gmra.mxu0 %v575
    %v655 = vpop.f32.mrf.mxu0
    %v656 = vadd.f32 %v636, %v655
    %657 = vdwg.mxu0
    %s658 = scalar_lea.vmem [#allocation3], 4
    %v659 = vld [vmem:[%s658] sm:$0x3]
    %v660 = vadd.f32 %v659, %v616
    %v661 = vtanh.pop %v660
    %v662 = vld [vmem:[%s3] sm:$0xff]
    %v663 = vld [vmem:[%s3 + $0x8] sm:$0xff]
    %v664 = vld [vmem:[%s3 + $0x10] sm:$0xff]
    %v665 = vld [vmem:[%s3 + $0x18] sm:$0xff]
    %v666 = vld [vmem:[%s3 + $0x20] sm:$0xff]
    %v667 = vld [vmem:[%s3 + $0x28] sm:$0xff]
    %v668 = vld [vmem:[%s3 + $0x30] sm:$0xff]
    %v669 = vld [vmem:[%s3 + $0x38] sm:$0xff]
    %v670 = vld [vmem:[%s3 + $0x40] sm:$0xff]
    %v671 = vld [vmem:[%s3 + $0x48] sm:$0xff]
    %v672 = vld [vmem:[%s3 + $0x50] sm:$0xff]
    %v673 = vld [vmem:[%s3 + $0x58] sm:$0xff]
    %v674 = vld [vmem:[%s3 + $0x60] sm:$0xff]
    %v675 = vld [vmem:[%s3 + $0x68] sm:$0xff]
    %v676 = vld [vmem:[%s3 + $0x70] sm:$0xff]
    %v677 = vld [vmem:[%s3 + $0x78] sm:$0xff]
    %678 = vmatpush.msra.mxu0 %v677
    %679 = vmatpush.msra.mxu0 %v676
    %680 = vmatpush.msra.mxu0 %v675
    %681 = vmatpush.msra.mxu0 %v674
    %682 = vmatpush.msra.mxu0 %v673
    %683 = vmatpush.msra.mxu0 %v672
    %684 = vmatpush.msra.mxu0 %v671
    %685 = vmatpush.msra.mxu0 %v670
    %686 = vmatpush.msra.mxu0 %v669
    %687 = vmatpush.msra.mxu0 %v668
    %688 = vmatpush.msra.mxu0 %v667
    %689 = vmatpush.msra.mxu0 %v666
    %690 = vmatpush.msra.mxu0 %v665
    %691 = vmatpush.msra.mxu0 %v664
    %692 = vmatpush.msra.mxu0 %v663
    %693 = vmatpush.msra.mxu0 %v662
    %694 = vmatmul.f32.gmra.mxu0 %v661
    %v695 = vpop.f32.mrf.mxu0
    %v696 = vadd.f32 %v656, %v695
    %697 = vdwg.mxu0
    %v698 = vadd.f32 %v696, %v113
    %v699 = vtanh.pop %v698
    %700 = vst [vmem:[#allocation2] sm:$0x3] %v661
    %701 = vst [vmem:[#allocation2 + $0x2] sm:$0x3] %v699
    %s702 = scalar_lea.vmem %s6, 4
    %703 = vst [vmem:[%s702] sm:$0x3] %v699
    %v704 = vld [vmem:[#allocation2] sm:$0xf]
    %v705 = vld [vmem:[%s2] sm:$0xff]
    %v706 = vld [vmem:[%s2 + $0x8] sm:$0xff]
    %v707 = vld [vmem:[%s2 + $0x10] sm:$0xff]
    %v708 = vld [vmem:[%s2 + $0x18] sm:$0xff]
    %v709 = vld [vmem:[%s2 + $0x20] sm:$0xff]
    %v710 = vld [vmem:[%s2 + $0x28] sm:$0xff]
    %v711 = vld [vmem:[%s2 + $0x30] sm:$0xff]
    %v712 = vld [vmem:[%s2 + $0x38] sm:$0xff]
    %v713 = vld [vmem:[%s2 + $0x40] sm:$0xff]
    %v714 = vld [vmem:[%s2 + $0x48] sm:$0xff]
    %v715 = vld [vmem:[%s2 + $0x50] sm:$0xff]
    %v716 = vld [vmem:[%s2 + $0x58] sm:$0xff]
    %v717 = vld [vmem:[%s2 + $0x60] sm:$0xff]
    %v718 = vld [vmem:[%s2 + $0x68] sm:$0xff]
    %v719 = vld [vmem:[%s2 + $0x70] sm:$0xff]
    %v720 = vld [vmem:[%s2 + $0x78] sm:$0xff]
    %v721 = vld [vmem:[%s2 + $0x80] sm:$0xff]
    %v722 = vld [vmem:[%s2 + $0x88] sm:$0xff]
    %v723 = vld [vmem:[%s2 + $0x90] sm:$0xff]
    %v724 = vld [vmem:[%s2 + $0x98] sm:$0xff]
    %v725 = vld [vmem:[%s2 + $0xa0] sm:$0xff]
    %v726 = vld [vmem:[%s2 + $0xa8] sm:$0xff]
    %v727 = vld [vmem:[%s2 + $0xb0] sm:$0xff]
    %v728 = vld [vmem:[%s2 + $0xb8] sm:$0xff]
    %v729 = vld [vmem:[%s2 + $0xc0] sm:$0xff]
    %v730 = vld [vmem:[%s2 + $0xc8] sm:$0xff]
    %v731 = vld [vmem:[%s2 + $0xd0] sm:$0xff]
    %v732 = vld [vmem:[%s2 + $0xd8] sm:$0xff]
    %v733 = vld [vmem:[%s2 + $0xe0] sm:$0xff]
    %v734 = vld [vmem:[%s2 + $0xe8] sm:$0xff]
    %v735 = vld [vmem:[%s2 + $0xf0] sm:$0xff]
    %v736 = vld [vmem:[%s2 + $0xf8] sm:$0xff]
    %v737 = vld [vmem:[%s2 + $0x100] sm:$0xff]
    %v738 = vld [vmem:[%s2 + $0x108] sm:$0xff]
    %v739 = vld [vmem:[%s2 + $0x110] sm:$0xff]
    %v740 = vld [vmem:[%s2 + $0x118] sm:$0xff]
    %v741 = vld [vmem:[%s2 + $0x120] sm:$0xff]
    %v742 = vld [vmem:[%s2 + $0x128] sm:$0xff]
    %v743 = vld [vmem:[%s2 + $0x130] sm:$0xff]
    %v744 = vld [vmem:[%s2 + $0x138] sm:$0xff]
    %v745 = vld [vmem:[%s2 + $0x140] sm:$0xff]
    %v746 = vld [vmem:[%s2 + $0x148] sm:$0xff]
    %v747 = vld [vmem:[%s2 + $0x150] sm:$0xff]
    %v748 = vld [vmem:[%s2 + $0x158] sm:$0xff]
    %v749 = vld [vmem:[%s2 + $0x160] sm:$0xff]
    %v750 = vld [vmem:[%s2 + $0x168] sm:$0xff]
    %v751 = vld [vmem:[%s2 + $0x170] sm:$0xff]
    %v752 = vld [vmem:[%s2 + $0x178] sm:$0xff]
    %v753 = vld [vmem:[%s2 + $0x180] sm:$0xff]
    %v754 = vld [vmem:[%s2 + $0x188] sm:$0xff]
    %v755 = vld [vmem:[%s2 + $0x190] sm:$0xff]
    %v756 = vld [vmem:[%s2 + $0x198] sm:$0xff]
    %v757 = vld [vmem:[%s2 + $0x1a0] sm:$0xff]
    %v758 = vld [vmem:[%s2 + $0x1a8] sm:$0xff]
    %v759 = vld [vmem:[%s2 + $0x1b0] sm:$0xff]
    %v760 = vld [vmem:[%s2 + $0x1b8] sm:$0xff]
    %v761 = vld [vmem:[%s2 + $0x1c0] sm:$0xff]
    %v762 = vld [vmem:[%s2 + $0x1c8] sm:$0xff]
    %v763 = vld [vmem:[%s2 + $0x1d0] sm:$0xff]
    %v764 = vld [vmem:[%s2 + $0x1d8] sm:$0xff]
    %v765 = vld [vmem:[%s2 + $0x1e0] sm:$0xff]
    %v766 = vld [vmem:[%s2 + $0x1e8] sm:$0xff]
    %v767 = vld [vmem:[%s2 + $0x1f0] sm:$0xff]
    %v768 = vld [vmem:[%s2 + $0x1f8] sm:$0xff]
    %770 = vst [vmem:[#allocation1] ss:$4 sm:$0xff] %v704
    %v771 = vld.sshfl [vmem:[#allocation1] sm:$0xff pattern:$0x73625140]
    %v772 = vld.sshfl [vmem:[#allocation1 + $0x8] sm:$0xff pattern:$0x73625140]
    %775 = vmatpush.msra.mxu0 %v735
    %776 = vmatpush.msra.mxu0 %v733
    %777 = vmatpush.msra.mxu0 %v731
    %778 = vmatpush.msra.mxu0 %v729
    %779 = vmatpush.msra.mxu0 %v727
    %780 = vmatpush.msra.mxu0 %v725
    %781 = vmatpush.msra.mxu0 %v723
    %782 = vmatpush.msra.mxu0 %v721
    %783 = vmatpush.msra.mxu0 %v719
    %784 = vmatpush.msra.mxu0 %v717
    %785 = vmatpush.msra.mxu0 %v715
    %786 = vmatpush.msra.mxu0 %v713
    %787 = vmatpush.msra.mxu0 %v711
    %788 = vmatpush.msra.mxu0 %v709
    %789 = vmatpush.msra.mxu0 %v707
    %790 = vmatpush.msra.mxu0 %v705
    %791 = vmatmul.f32.gmra.mxu0 %v771
    %v792 = vpop.f32.mrf.mxu0
    %v793 = vadd.f32 0.0, %v792
    %794 = vdwg.mxu0
    %795 = vmatpush.msra.mxu0 %v767
    %796 = vmatpush.msra.mxu0 %v765
    %797 = vmatpush.msra.mxu0 %v763
    %798 = vmatpush.msra.mxu0 %v761
    %799 = vmatpush.msra.mxu0 %v759
    %800 = vmatpush.msra.mxu0 %v757
    %801 = vmatpush.msra.mxu0 %v755
    %802 = vmatpush.msra.mxu0 %v753
    %803 = vmatpush.msra.mxu0 %v751
    %804 = vmatpush.msra.mxu0 %v749
    %805 = vmatpush.msra.mxu0 %v747
    %806 = vmatpush.msra.mxu0 %v745
    %807 = vmatpush.msra.mxu0 %v743
    %808 = vmatpush.msra.mxu0 %v741
    %809 = vmatpush.msra.mxu0 %v739
    %810 = vmatpush.msra.mxu0 %v737
    %811 = vmatmul.f32.gmra.mxu0 %v772
    %v812 = vpop.f32.mrf.mxu0
    %v813 = vadd.f32 %v793, %v812
    %814 = vdwg.mxu0
    %815 = vmatpush.msra.mxu0 %v736
    %816 = vmatpush.msra.mxu0 %v734
    %817 = vmatpush.msra.mxu0 %v732
    %818 = vmatpush.msra.mxu0 %v730
    %819 = vmatpush.msra.mxu0 %v728
    %820 = vmatpush.msra.mxu0 %v726
    %821 = vmatpush.msra.mxu0 %v724
    %822 = vmatpush.msra.mxu0 %v722
    %823 = vmatpush.msra.mxu0 %v720
    %824 = vmatpush.msra.mxu0 %v718
    %825 = vmatpush.msra.mxu0 %v716
    %826 = vmatpush.msra.mxu0 %v714
    %827 = vmatpush.msra.mxu0 %v712
    %828 = vmatpush.msra.mxu0 %v710
    %829 = vmatpush.msra.mxu0 %v708
    %830 = vmatpush.msra.mxu0 %v706
    %831 = vmatmul.f32.gmra.mxu0 %v771
    %v832 = vpop.f32.mrf.mxu0
    %v833 = vadd.f32 0.0, %v832
    %834 = vdwg.mxu0
    %835 = vmatpush.msra.mxu0 %v768
    %836 = vmatpush.msra.mxu0 %v766
    %837 = vmatpush.msra.mxu0 %v764
    %838 = vmatpush.msra.mxu0 %v762
    %839 = vmatpush.msra.mxu0 %v760
    %840 = vmatpush.msra.mxu0 %v758
    %841 = vmatpush.msra.mxu0 %v756
    %842 = vmatpush.msra.mxu0 %v754
    %843 = vmatpush.msra.mxu0 %v752
    %844 = vmatpush.msra.mxu0 %v750
    %845 = vmatpush.msra.mxu0 %v748
    %846 = vmatpush.msra.mxu0 %v746
    %847 = vmatpush.msra.mxu0 %v744
    %848 = vmatpush.msra.mxu0 %v742
    %849 = vmatpush.msra.mxu0 %v740
    %850 = vmatpush.msra.mxu0 %v738
    %851 = vmatmul.f32.gmra.mxu0 %v772
    %v852 = vpop.f32.mrf.mxu0
    %v853 = vadd.f32 %v833, %v852
    %854 = vdwg.mxu0
    %s855 = scalar_lea.vmem [#allocation3], 6
    %v856 = vld [vmem:[%s855] sm:$0x3]
    %v857 = vadd.f32 %v856, %v813
    %v858 = vtanh.pop %v857
    %v859 = vld [vmem:[%s3] sm:$0xff]
    %v860 = vld [vmem:[%s3 + $0x8] sm:$0xff]
    %v861 = vld [vmem:[%s3 + $0x10] sm:$0xff]
    %v862 = vld [vmem:[%s3 + $0x18] sm:$0xff]
    %v863 = vld [vmem:[%s3 + $0x20] sm:$0xff]
    %v864 = vld [vmem:[%s3 + $0x28] sm:$0xff]
    %v865 = vld [vmem:[%s3 + $0x30] sm:$0xff]
    %v866 = vld [vmem:[%s3 + $0x38] sm:$0xff]
    %v867 = vld [vmem:[%s3 + $0x40] sm:$0xff]
    %v868 = vld [vmem:[%s3 + $0x48] sm:$0xff]
    %v869 = vld [vmem:[%s3 + $0x50] sm:$0xff]
    %v870 = vld [vmem:[%s3 + $0x58] sm:$0xff]
    %v871 = vld [vmem:[%s3 + $0x60] sm:$0xff]
    %v872 = vld [vmem:[%s3 + $0x68] sm:$0xff]
    %v873 = vld [vmem:[%s3 + $0x70] sm:$0xff]
    %v874 = vld [vmem:[%s3 + $0x78] sm:$0xff]
    %875 = vmatpush.msra.mxu0 %v874
    %876 = vmatpush.msra.mxu0 %v873
    %877 = vmatpush.msra.mxu0 %v872
    %878 = vmatpush.msra.mxu0 %v871
    %879 = vmatpush.msra.mxu0 %v870
    %880 = vmatpush.msra.mxu0 %v869
    %881 = vmatpush.msra.mxu0 %v868
    %882 = vmatpush.msra.mxu0 %v867
    %883 = vmatpush.msra.mxu0 %v866
    %884 = vmatpush.msra.mxu0 %v865
    %885 = vmatpush.msra.mxu0 %v864
    %886 = vmatpush.msra.mxu0 %v863
    %887 = vmatpush.msra.mxu0 %v862
    %888 = vmatpush.msra.mxu0 %v861
    %889 = vmatpush.msra.mxu0 %v860
    %890 = vmatpush.msra.mxu0 %v859
    %891 = vmatmul.f32.gmra.mxu0 %v858
    %v892 = vpop.f32.mrf.mxu0
    %v893 = vadd.f32 %v853, %v892
    %894 = vdwg.mxu0
    %v895 = vadd.f32 %v893, %v113
    %v896 = vtanh.pop %v895
    %897 = vst [vmem:[#allocation2] sm:$0x3] %v858
    %898 = vst [vmem:[#allocation2 + $0x2] sm:$0x3] %v896
    %s899 = scalar_lea.vmem %s6, 6
    %900 = vst [vmem:[%s899] sm:$0x3] %v896
    %v901 = vld [vmem:[#allocation2] sm:$0xf]
    %v902 = vld [vmem:[%s2] sm:$0xff]
    %v903 = vld [vmem:[%s2 + $0x8] sm:$0xff]
    %v904 = vld [vmem:[%s2 + $0x10] sm:$0xff]
    %v905 = vld [vmem:[%s2 + $0x18] sm:$0xff]
    %v906 = vld [vmem:[%s2 + $0x20] sm:$0xff]
    %v907 = vld [vmem:[%s2 + $0x28] sm:$0xff]
    %v908 = vld [vmem:[%s2 + $0x30] sm:$0xff]
    %v909 = vld [vmem:[%s2 + $0x38] sm:$0xff]
    %v910 = vld [vmem:[%s2 + $0x40] sm:$0xff]
    %v911 = vld [vmem:[%s2 + $0x48] sm:$0xff]
    %v912 = vld [vmem:[%s2 + $0x50] sm:$0xff]
    %v913 = vld [vmem:[%s2 + $0x58] sm:$0xff]
    %v914 = vld [vmem:[%s2 + $0x60] sm:$0xff]
    %v915 = vld [vmem:[%s2 + $0x68] sm:$0xff]
    %v916 = vld [vmem:[%s2 + $0x70] sm:$0xff]
    %v917 = vld [vmem:[%s2 + $0x78] sm:$0xff]
    %v918 = vld [vmem:[%s2 + $0x80] sm:$0xff]
    %v919 = vld [vmem:[%s2 + $0x88] sm:$0xff]
    %v920 = vld [vmem:[%s2 + $0x90] sm:$0xff]
    %v921 = vld [vmem:[%s2 + $0x98] sm:$0xff]
    %v922 = vld [vmem:[%s2 + $0xa0] sm:$0xff]
    %v923 = vld [vmem:[%s2 + $0xa8] sm:$0xff]
    %v924 = vld [vmem:[%s2 + $0xb0] sm:$0xff]
    %v925 = vld [vmem:[%s2 + $0xb8] sm:$0xff]
    %v926 = vld [vmem:[%s2 + $0xc0] sm:$0xff]
    %v927 = vld [vmem:[%s2 + $0xc8] sm:$0xff]
    %v928 = vld [vmem:[%s2 + $0xd0] sm:$0xff]
    %v929 = vld [vmem:[%s2 + $0xd8] sm:$0xff]
    %v930 = vld [vmem:[%s2 + $0xe0] sm:$0xff]
    %v931 = vld [vmem:[%s2 + $0xe8] sm:$0xff]
    %v932 = vld [vmem:[%s2 + $0xf0] sm:$0xff]
    %v933 = vld [vmem:[%s2 + $0xf8] sm:$0xff]
    %v934 = vld [vmem:[%s2 + $0x100] sm:$0xff]
    %v935 = vld [vmem:[%s2 + $0x108] sm:$0xff]
    %v936 = vld [vmem:[%s2 + $0x110] sm:$0xff]
    %v937 = vld [vmem:[%s2 + $0x118] sm:$0xff]
    %v938 = vld [vmem:[%s2 + $0x120] sm:$0xff]
    %v939 = vld [vmem:[%s2 + $0x128] sm:$0xff]
    %v940 = vld [vmem:[%s2 + $0x130] sm:$0xff]
    %v941 = vld [vmem:[%s2 + $0x138] sm:$0xff]
    %v942 = vld [vmem:[%s2 + $0x140] sm:$0xff]
    %v943 = vld [vmem:[%s2 + $0x148] sm:$0xff]
    %v944 = vld [vmem:[%s2 + $0x150] sm:$0xff]
    %v945 = vld [vmem:[%s2 + $0x158] sm:$0xff]
    %v946 = vld [vmem:[%s2 + $0x160] sm:$0xff]
    %v947 = vld [vmem:[%s2 + $0x168] sm:$0xff]
    %v948 = vld [vmem:[%s2 + $0x170] sm:$0xff]
    %v949 = vld [vmem:[%s2 + $0x178] sm:$0xff]
    %v950 = vld [vmem:[%s2 + $0x180] sm:$0xff]
    %v951 = vld [vmem:[%s2 + $0x188] sm:$0xff]
    %v952 = vld [vmem:[%s2 + $0x190] sm:$0xff]
    %v953 = vld [vmem:[%s2 + $0x198] sm:$0xff]
    %v954 = vld [vmem:[%s2 + $0x1a0] sm:$0xff]
    %v955 = vld [vmem:[%s2 + $0x1a8] sm:$0xff]
    %v956 = vld [vmem:[%s2 + $0x1b0] sm:$0xff]
    %v957 = vld [vmem:[%s2 + $0x1b8] sm:$0xff]
    %v958 = vld [vmem:[%s2 + $0x1c0] sm:$0xff]
    %v959 = vld [vmem:[%s2 + $0x1c8] sm:$0xff]
    %v960 = vld [vmem:[%s2 + $0x1d0] sm:$0xff]
    %v961 = vld [vmem:[%s2 + $0x1d8] sm:$0xff]
    %v962 = vld [vmem:[%s2 + $0x1e0] sm:$0xff]
    %v963 = vld [vmem:[%s2 + $0x1e8] sm:$0xff]
    %v964 = vld [vmem:[%s2 + $0x1f0] sm:$0xff]
    %v965 = vld [vmem:[%s2 + $0x1f8] sm:$0xff]
    %967 = vst [vmem:[#allocation1] ss:$4 sm:$0xff] %v901
    %v968 = vld.sshfl [vmem:[#allocation1] sm:$0xff pattern:$0x73625140]
    %v969 = vld.sshfl [vmem:[#allocation1 + $0x8] sm:$0xff pattern:$0x73625140]
    %972 = vmatpush.msra.mxu0 %v932
    %973 = vmatpush.msra.mxu0 %v930
    %974 = vmatpush.msra.mxu0 %v928
    %975 = vmatpush.msra.mxu0 %v926
    %976 = vmatpush.msra.mxu0 %v924
    %977 = vmatpush.msra.mxu0 %v922
    %978 = vmatpush.msra.mxu0 %v920
    %979 = vmatpush.msra.mxu0 %v918
    %980 = vmatpush.msra.mxu0 %v916
    %981 = vmatpush.msra.mxu0 %v914
    %982 = vmatpush.msra.mxu0 %v912
    %983 = vmatpush.msra.mxu0 %v910
    %984 = vmatpush.msra.mxu0 %v908
    %985 = vmatpush.msra.mxu0 %v906
    %986 = vmatpush.msra.mxu0 %v904
    %987 = vmatpush.msra.mxu0 %v902
    %988 = vmatmul.f32.gmra.mxu0 %v968
    %v989 = vpop.f32.mrf.mxu0
    %v990 = vadd.f32 0.0, %v989
    %991 = vdwg.mxu0
    %992 = vmatpush.msra.mxu0 %v964
    %993 = vmatpush.msra.mxu0 %v962
    %994 = vmatpush.msra.mxu0 %v960
    %995 = vmatpush.msra.mxu0 %v958
    %996 = vmatpush.msra.mxu0 %v956
    %997 = vmatpush.msra.mxu0 %v954
    %998 = vmatpush.msra.mxu0 %v952
    %999 = vmatpush.msra.mxu0 %v950
    %1000 = vmatpush.msra.mxu0 %v948
    %1001 = vmatpush.msra.mxu0 %v946
    %1002 = vmatpush.msra.mxu0 %v944
    %1003 = vmatpush.msra.mxu0 %v942
    %1004 = vmatpush.msra.mxu0 %v940
    %1005 = vmatpush.msra.mxu0 %v938
    %1006 = vmatpush.msra.mxu0 %v936
    %1007 = vmatpush.msra.mxu0 %v934
    %1008 = vmatmul.f32.gmra.mxu0 %v969
    %v1009 = vpop.f32.mrf.mxu0
    %v1010 = vadd.f32 %v990, %v1009
    %1011 = vdwg.mxu0
    %1012 = vmatpush.msra.mxu0 %v933
    %1013 = vmatpush.msra.mxu0 %v931
    %1014 = vmatpush.msra.mxu0 %v929
    %1015 = vmatpush.msra.mxu0 %v927
    %1016 = vmatpush.msra.mxu0 %v925
    %1017 = vmatpush.msra.mxu0 %v923
    %1018 = vmatpush.msra.mxu0 %v921
    %1019 = vmatpush.msra.mxu0 %v919
    %1020 = vmatpush.msra.mxu0 %v917
    %1021 = vmatpush.msra.mxu0 %v915
    %1022 = vmatpush.msra.mxu0 %v913
    %1023 = vmatpush.msra.mxu0 %v911
    %1024 = vmatpush.msra.mxu0 %v909
    %1025 = vmatpush.msra.mxu0 %v907
    %1026 = vmatpush.msra.mxu0 %v905
    %1027 = vmatpush.msra.mxu0 %v903
    %1028 = vmatmul.f32.gmra.mxu0 %v968
    %v1029 = vpop.f32.mrf.mxu0
    %v1030 = vadd.f32 0.0, %v1029
    %1031 = vdwg.mxu0
    %1032 = vmatpush.msra.mxu0 %v965
    %1033 = vmatpush.msra.mxu0 %v963
    %1034 = vmatpush.msra.mxu0 %v961
    %1035 = vmatpush.msra.mxu0 %v959
    %1036 = vmatpush.msra.mxu0 %v957
    %1037 = vmatpush.msra.mxu0 %v955
    %1038 = vmatpush.msra.mxu0 %v953
    %1039 = vmatpush.msra.mxu0 %v951
    %1040 = vmatpush.msra.mxu0 %v949
    %1041 = vmatpush.msra.mxu0 %v947
    %1042 = vmatpush.msra.mxu0 %v945
    %1043 = vmatpush.msra.mxu0 %v943
    %1044 = vmatpush.msra.mxu0 %v941
    %1045 = vmatpush.msra.mxu0 %v939
    %1046 = vmatpush.msra.mxu0 %v937
    %1047 = vmatpush.msra.mxu0 %v935
    %1048 = vmatmul.f32.gmra.mxu0 %v969
    %v1049 = vpop.f32.mrf.mxu0
    %v1050 = vadd.f32 %v1030, %v1049
    %1051 = vdwg.mxu0
    %s1052 = scalar_lea.vmem [#allocation3], 8
    %v1053 = vld [vmem:[%s1052] sm:$0x3]
    %v1054 = vadd.f32 %v1053, %v1010
    %v1055 = vtanh.pop %v1054
    %v1056 = vld [vmem:[%s3] sm:$0xff]
    %v1057 = vld [vmem:[%s3 + $0x8] sm:$0xff]
    %v1058 = vld [vmem:[%s3 + $0x10] sm:$0xff]
    %v1059 = vld [vmem:[%s3 + $0x18] sm:$0xff]
    %v1060 = vld [vmem:[%s3 + $0x20] sm:$0xff]
    %v1061 = vld [vmem:[%s3 + $0x28] sm:$0xff]
    %v1062 = vld [vmem:[%s3 + $0x30] sm:$0xff]
    %v1063 = vld [vmem:[%s3 + $0x38] sm:$0xff]
    %v1064 = vld [vmem:[%s3 + $0x40] sm:$0xff]
    %v1065 = vld [vmem:[%s3 + $0x48] sm:$0xff]
    %v1066 = vld [vmem:[%s3 + $0x50] sm:$0xff]
    %v1067 = vld [vmem:[%s3 + $0x58] sm:$0xff]
    %v1068 = vld [vmem:[%s3 + $0x60] sm:$0xff]
    %v1069 = vld [vmem:[%s3 + $0x68] sm:$0xff]
    %v1070 = vld [vmem:[%s3 + $0x70] sm:$0xff]
    %v1071 = vld [vmem:[%s3 + $0x78] sm:$0xff]
    %1072 = vmatpush.msra.mxu0 %v1071
    %1073 = vmatpush.msra.mxu0 %v1070
    %1074 = vmatpush.msra.mxu0 %v1069
    %1075 = vmatpush.msra.mxu0 %v1068
    %1076 = vmatpush.msra.mxu0 %v1067
    %1077 = vmatpush.msra.mxu0 %v1066
    %1078 = vmatpush.msra.mxu0 %v1065
    %1079 = vmatpush.msra.mxu0 %v1064
    %1080 = vmatpush.msra.mxu0 %v1063
    %1081 = vmatpush.msra.mxu0 %v1062
    %1082 = vmatpush.msra.mxu0 %v1061
    %1083 = vmatpush.msra.mxu0 %v1060
    %1084 = vmatpush.msra.mxu0 %v1059
    %1085 = vmatpush.msra.mxu0 %v1058
    %1086 = vmatpush.msra.mxu0 %v1057
    %1087 = vmatpush.msra.mxu0 %v1056
    %1088 = vmatmul.f32.gmra.mxu0 %v1055
    %v1089 = vpop.f32.mrf.mxu0
    %v1090 = vadd.f32 %v1050, %v1089
    %1091 = vdwg.mxu0
    %v1092 = vadd.f32 %v1090, %v113
    %v1093 = vtanh.pop %v1092
    %1094 = vst [vmem:[#allocation2] sm:$0x3] %v1055
    %1095 = vst [vmem:[#allocation2 + $0x2] sm:$0x3] %v1093
    %s1096 = scalar_lea.vmem %s6, 8
    %1097 = vst [vmem:[%s1096] sm:$0x3] %v1093
    %v1098 = vld [vmem:[#allocation2] sm:$0xf]
    %v1099 = vld [vmem:[%s2] sm:$0xff]
    %v1100 = vld [vmem:[%s2 + $0x8] sm:$0xff]
    %v1101 = vld [vmem:[%s2 + $0x10] sm:$0xff]
    %v1102 = vld [vmem:[%s2 + $0x18] sm:$0xff]
    %v1103 = vld [vmem:[%s2 + $0x20] sm:$0xff]
    %v1104 = vld [vmem:[%s2 + $0x28] sm:$0xff]
    %v1105 = vld [vmem:[%s2 + $0x30] sm:$0xff]
    %v1106 = vld [vmem:[%s2 + $0x38] sm:$0xff]
    %v1107 = vld [vmem:[%s2 + $0x40] sm:$0xff]
    %v1108 = vld [vmem:[%s2 + $0x48] sm:$0xff]
    %v1109 = vld [vmem:[%s2 + $0x50] sm:$0xff]
    %v1110 = vld [vmem:[%s2 + $0x58] sm:$0xff]
    %v1111 = vld [vmem:[%s2 + $0x60] sm:$0xff]
    %v1112 = vld [vmem:[%s2 + $0x68] sm:$0xff]
    %v1113 = vld [vmem:[%s2 + $0x70] sm:$0xff]
    %v1114 = vld [vmem:[%s2 + $0x78] sm:$0xff]
    %v1115 = vld [vmem:[%s2 + $0x80] sm:$0xff]
    %v1116 = vld [vmem:[%s2 + $0x88] sm:$0xff]
    %v1117 = vld [vmem:[%s2 + $0x90] sm:$0xff]
    %v1118 = vld [vmem:[%s2 + $0x98] sm:$0xff]
    %v1119 = vld [vmem:[%s2 + $0xa0] sm:$0xff]
    %v1120 = vld [vmem:[%s2 + $0xa8] sm:$0xff]
    %v1121 = vld [vmem:[%s2 + $0xb0] sm:$0xff]
    %v1122 = vld [vmem:[%s2 + $0xb8] sm:$0xff]
    %v1123 = vld [vmem:[%s2 + $0xc0] sm:$0xff]
    %v1124 = vld [vmem:[%s2 + $0xc8] sm:$0xff]
    %v1125 = vld [vmem:[%s2 + $0xd0] sm:$0xff]
    %v1126 = vld [vmem:[%s2 + $0xd8] sm:$0xff]
    %v1127 = vld [vmem:[%s2 + $0xe0] sm:$0xff]
    %v1128 = vld [vmem:[%s2 + $0xe8] sm:$0xff]
    %v1129 = vld [vmem:[%s2 + $0xf0] sm:$0xff]
    %v1130 = vld [vmem:[%s2 + $0xf8] sm:$0xff]
    %v1131 = vld [vmem:[%s2 + $0x100] sm:$0xff]
    %v1132 = vld [vmem:[%s2 + $0x108] sm:$0xff]
    %v1133 = vld [vmem:[%s2 + $0x110] sm:$0xff]
    %v1134 = vld [vmem:[%s2 + $0x118] sm:$0xff]
    %v1135 = vld [vmem:[%s2 + $0x120] sm:$0xff]
    %v1136 = vld [vmem:[%s2 + $0x128] sm:$0xff]
    %v1137 = vld [vmem:[%s2 + $0x130] sm:$0xff]
    %v1138 = vld [vmem:[%s2 + $0x138] sm:$0xff]
    %v1139 = vld [vmem:[%s2 + $0x140] sm:$0xff]
    %v1140 = vld [vmem:[%s2 + $0x148] sm:$0xff]
    %v1141 = vld [vmem:[%s2 + $0x150] sm:$0xff]
    %v1142 = vld [vmem:[%s2 + $0x158] sm:$0xff]
    %v1143 = vld [vmem:[%s2 + $0x160] sm:$0xff]
    %v1144 = vld [vmem:[%s2 + $0x168] sm:$0xff]
    %v1145 = vld [vmem:[%s2 + $0x170] sm:$0xff]
    %v1146 = vld [vmem:[%s2 + $0x178] sm:$0xff]
    %v1147 = vld [vmem:[%s2 + $0x180] sm:$0xff]
    %v1148 = vld [vmem:[%s2 + $0x188] sm:$0xff]
    %v1149 = vld [vmem:[%s2 + $0x190] sm:$0xff]
    %v1150 = vld [vmem:[%s2 + $0x198] sm:$0xff]
    %v1151 = vld [vmem:[%s2 + $0x1a0] sm:$0xff]
    %v1152 = vld [vmem:[%s2 + $0x1a8] sm:$0xff]
    %v1153 = vld [vmem:[%s2 + $0x1b0] sm:$0xff]
    %v1154 = vld [vmem:[%s2 + $0x1b8] sm:$0xff]
    %v1155 = vld [vmem:[%s2 + $0x1c0] sm:$0xff]
    %v1156 = vld [vmem:[%s2 + $0x1c8] sm:$0xff]
    %v1157 = vld [vmem:[%s2 + $0x1d0] sm:$0xff]
    %v1158 = vld [vmem:[%s2 + $0x1d8] sm:$0xff]
    %v1159 = vld [vmem:[%s2 + $0x1e0] sm:$0xff]
    %v1160 = vld [vmem:[%s2 + $0x1e8] sm:$0xff]
    %v1161 = vld [vmem:[%s2 + $0x1f0] sm:$0xff]
    %v1162 = vld [vmem:[%s2 + $0x1f8] sm:$0xff]
    %1164 = vst [vmem:[#allocation1] ss:$4 sm:$0xff] %v1098
    %v1165 = vld.sshfl [vmem:[#allocation1] sm:$0xff pattern:$0x73625140]
    %v1166 = vld.sshfl [vmem:[#allocation1 + $0x8] sm:$0xff pattern:$0x73625140]
    %1169 = vmatpush.msra.mxu0 %v1129
    %1170 = vmatpush.msra.mxu0 %v1127
    %1171 = vmatpush.msra.mxu0 %v1125
    %1172 = vmatpush.msra.mxu0 %v1123
    %1173 = vmatpush.msra.mxu0 %v1121
    %1174 = vmatpush.msra.mxu0 %v1119
    %1175 = vmatpush.msra.mxu0 %v1117
    %1176 = vmatpush.msra.mxu0 %v1115
    %1177 = vmatpush.msra.mxu0 %v1113
    %1178 = vmatpush.msra.mxu0 %v1111
    %1179 = vmatpush.msra.mxu0 %v1109
    %1180 = vmatpush.msra.mxu0 %v1107
    %1181 = vmatpush.msra.mxu0 %v1105
    %1182 = vmatpush.msra.mxu0 %v1103
    %1183 = vmatpush.msra.mxu0 %v1101
    %1184 = vmatpush.msra.mxu0 %v1099
    %1185 = vmatmul.f32.gmra.mxu0 %v1165
    %v1186 = vpop.f32.mrf.mxu0
    %v1187 = vadd.f32 0.0, %v1186
    %1188 = vdwg.mxu0
    %1189 = vmatpush.msra.mxu0 %v1161
    %1190 = vmatpush.msra.mxu0 %v1159
    %1191 = vmatpush.msra.mxu0 %v1157
    %1192 = vmatpush.msra.mxu0 %v1155
    %1193 = vmatpush.msra.mxu0 %v1153
    %1194 = vmatpush.msra.mxu0 %v1151
    %1195 = vmatpush.msra.mxu0 %v1149
    %1196 = vmatpush.msra.mxu0 %v1147
    %1197 = vmatpush.msra.mxu0 %v1145
    %1198 = vmatpush.msra.mxu0 %v1143
    %1199 = vmatpush.msra.mxu0 %v1141
    %1200 = vmatpush.msra.mxu0 %v1139
    %1201 = vmatpush.msra.mxu0 %v1137
    %1202 = vmatpush.msra.mxu0 %v1135
    %1203 = vmatpush.msra.mxu0 %v1133
    %1204 = vmatpush.msra.mxu0 %v1131
    %1205 = vmatmul.f32.gmra.mxu0 %v1166
    %v1206 = vpop.f32.mrf.mxu0
    %v1207 = vadd.f32 %v1187, %v1206
    %1208 = vdwg.mxu0
    %1209 = vmatpush.msra.mxu0 %v1130
    %1210 = vmatpush.msra.mxu0 %v1128
    %1211 = vmatpush.msra.mxu0 %v1126
    %1212 = vmatpush.msra.mxu0 %v1124
    %1213 = vmatpush.msra.mxu0 %v1122
    %1214 = vmatpush.msra.mxu0 %v1120
    %1215 = vmatpush.msra.mxu0 %v1118
    %1216 = vmatpush.msra.mxu0 %v1116
    %1217 = vmatpush.msra.mxu0 %v1114
    %1218 = vmatpush.msra.mxu0 %v1112
    %1219 = vmatpush.msra.mxu0 %v1110
    %1220 = vmatpush.msra.mxu0 %v1108
    %1221 = vmatpush.msra.mxu0 %v1106
    %1222 = vmatpush.msra.mxu0 %v1104
    %1223 = vmatpush.msra.mxu0 %v1102
    %1224 = vmatpush.msra.mxu0 %v1100
    %1225 = vmatmul.f32.gmra.mxu0 %v1165
    %v1226 = vpop.f32.mrf.mxu0
    %v1227 = vadd.f32 0.0, %v1226
    %1228 = vdwg.mxu0
    %1229 = vmatpush.msra.mxu0 %v1162
    %1230 = vmatpush.msra.mxu0 %v1160
    %1231 = vmatpush.msra.mxu0 %v1158
    %1232 = vmatpush.msra.mxu0 %v1156
    %1233 = vmatpush.msra.mxu0 %v1154
    %1234 = vmatpush.msra.mxu0 %v1152
    %1235 = vmatpush.msra.mxu0 %v1150
    %1236 = vmatpush.msra.mxu0 %v1148
    %1237 = vmatpush.msra.mxu0 %v1146
    %1238 = vmatpush.msra.mxu0 %v1144
    %1239 = vmatpush.msra.mxu0 %v1142
    %1240 = vmatpush.msra.mxu0 %v1140
    %1241 = vmatpush.msra.mxu0 %v1138
    %1242 = vmatpush.msra.mxu0 %v1136
    %1243 = vmatpush.msra.mxu0 %v1134
    %1244 = vmatpush.msra.mxu0 %v1132
    %1245 = vmatmul.f32.gmra.mxu0 %v1166
    %v1246 = vpop.f32.mrf.mxu0
    %v1247 = vadd.f32 %v1227, %v1246
    %1248 = vdwg.mxu0
    %s1249 = scalar_lea.vmem [#allocation3], 10
    %v1250 = vld [vmem:[%s1249] sm:$0x3]
    %v1251 = vadd.f32 %v1250, %v1207
    %v1252 = vtanh.pop %v1251
    %v1253 = vld [vmem:[%s3] sm:$0xff]
    %v1254 = vld [vmem:[%s3 + $0x8] sm:$0xff]
    %v1255 = vld [vmem:[%s3 + $0x10] sm:$0xff]
    %v1256 = vld [vmem:[%s3 + $0x18] sm:$0xff]
    %v1257 = vld [vmem:[%s3 + $0x20] sm:$0xff]
    %v1258 = vld [vmem:[%s3 + $0x28] sm:$0xff]
    %v1259 = vld [vmem:[%s3 + $0x30] sm:$0xff]
    %v1260 = vld [vmem:[%s3 + $0x38] sm:$0xff]
    %v1261 = vld [vmem:[%s3 + $0x40] sm:$0xff]
    %v1262 = vld [vmem:[%s3 + $0x48] sm:$0xff]
    %v1263 = vld [vmem:[%s3 + $0x50] sm:$0xff]
    %v1264 = vld [vmem:[%s3 + $0x58] sm:$0xff]
    %v1265 = vld [vmem:[%s3 + $0x60] sm:$0xff]
    %v1266 = vld [vmem:[%s3 + $0x68] sm:$0xff]
    %v1267 = vld [vmem:[%s3 + $0x70] sm:$0xff]
    %v1268 = vld [vmem:[%s3 + $0x78] sm:$0xff]
    %1269 = vmatpush.msra.mxu0 %v1268
    %1270 = vmatpush.msra.mxu0 %v1267
    %1271 = vmatpush.msra.mxu0 %v1266
    %1272 = vmatpush.msra.mxu0 %v1265
    %1273 = vmatpush.msra.mxu0 %v1264
    %1274 = vmatpush.msra.mxu0 %v1263
    %1275 = vmatpush.msra.mxu0 %v1262
    %1276 = vmatpush.msra.mxu0 %v1261
    %1277 = vmatpush.msra.mxu0 %v1260
    %1278 = vmatpush.msra.mxu0 %v1259
    %1279 = vmatpush.msra.mxu0 %v1258
    %1280 = vmatpush.msra.mxu0 %v1257
    %1281 = vmatpush.msra.mxu0 %v1256
    %1282 = vmatpush.msra.mxu0 %v1255
    %1283 = vmatpush.msra.mxu0 %v1254
    %1284 = vmatpush.msra.mxu0 %v1253
    %1285 = vmatmul.f32.gmra.mxu0 %v1252
    %v1286 = vpop.f32.mrf.mxu0
    %v1287 = vadd.f32 %v1247, %v1286
    %1288 = vdwg.mxu0
    %v1289 = vadd.f32 %v1287, %v113
    %v1290 = vtanh.pop %v1289
    %1291 = vst [vmem:[#allocation2] sm:$0x3] %v1252
    %1292 = vst [vmem:[#allocation2 + $0x2] sm:$0x3] %v1290
    %s1293 = scalar_lea.vmem %s6, 10
    %1294 = vst [vmem:[%s1293] sm:$0x3] %v1290
    %v1295 = vld [vmem:[#allocation2] sm:$0xf]
    %v1296 = vld [vmem:[%s2] sm:$0xff]
    %v1297 = vld [vmem:[%s2 + $0x8] sm:$0xff]
    %v1298 = vld [vmem:[%s2 + $0x10] sm:$0xff]
    %v1299 = vld [vmem:[%s2 + $0x18] sm:$0xff]
    %v1300 = vld [vmem:[%s2 + $0x20] sm:$0xff]
    %v1301 = vld [vmem:[%s2 + $0x28] sm:$0xff]
    %v1302 = vld [vmem:[%s2 + $0x30] sm:$0xff]
    %v1303 = vld [vmem:[%s2 + $0x38] sm:$0xff]
    %v1304 = vld [vmem:[%s2 + $0x40] sm:$0xff]
    %v1305 = vld [vmem:[%s2 + $0x48] sm:$0xff]
    %v1306 = vld [vmem:[%s2 + $0x50] sm:$0xff]
    %v1307 = vld [vmem:[%s2 + $0x58] sm:$0xff]
    %v1308 = vld [vmem:[%s2 + $0x60] sm:$0xff]
    %v1309 = vld [vmem:[%s2 + $0x68] sm:$0xff]
    %v1310 = vld [vmem:[%s2 + $0x70] sm:$0xff]
    %v1311 = vld [vmem:[%s2 + $0x78] sm:$0xff]
    %v1312 = vld [vmem:[%s2 + $0x80] sm:$0xff]
    %v1313 = vld [vmem:[%s2 + $0x88] sm:$0xff]
    %v1314 = vld [vmem:[%s2 + $0x90] sm:$0xff]
    %v1315 = vld [vmem:[%s2 + $0x98] sm:$0xff]
    %v1316 = vld [vmem:[%s2 + $0xa0] sm:$0xff]
    %v1317 = vld [vmem:[%s2 + $0xa8] sm:$0xff]
    %v1318 = vld [vmem:[%s2 + $0xb0] sm:$0xff]
    %v1319 = vld [vmem:[%s2 + $0xb8] sm:$0xff]
    %v1320 = vld [vmem:[%s2 + $0xc0] sm:$0xff]
    %v1321 = vld [vmem:[%s2 + $0xc8] sm:$0xff]
    %v1322 = vld [vmem:[%s2 + $0xd0] sm:$0xff]
    %v1323 = vld [vmem:[%s2 + $0xd8] sm:$0xff]
    %v1324 = vld [vmem:[%s2 + $0xe0] sm:$0xff]
    %v1325 = vld [vmem:[%s2 + $0xe8] sm:$0xff]
    %v1326 = vld [vmem:[%s2 + $0xf0] sm:$0xff]
    %v1327 = vld [vmem:[%s2 + $0xf8] sm:$0xff]
    %v1328 = vld [vmem:[%s2 + $0x100] sm:$0xff]
    %v1329 = vld [vmem:[%s2 + $0x108] sm:$0xff]
    %v1330 = vld [vmem:[%s2 + $0x110] sm:$0xff]
    %v1331 = vld [vmem:[%s2 + $0x118] sm:$0xff]
    %v1332 = vld [vmem:[%s2 + $0x120] sm:$0xff]
    %v1333 = vld [vmem:[%s2 + $0x128] sm:$0xff]
    %v1334 = vld [vmem:[%s2 + $0x130] sm:$0xff]
    %v1335 = vld [vmem:[%s2 + $0x138] sm:$0xff]
    %v1336 = vld [vmem:[%s2 + $0x140] sm:$0xff]
    %v1337 = vld [vmem:[%s2 + $0x148] sm:$0xff]
    %v1338 = vld [vmem:[%s2 + $0x150] sm:$0xff]
    %v1339 = vld [vmem:[%s2 + $0x158] sm:$0xff]
    %v1340 = vld [vmem:[%s2 + $0x160] sm:$0xff]
    %v1341 = vld [vmem:[%s2 + $0x168] sm:$0xff]
    %v1342 = vld [vmem:[%s2 + $0x170] sm:$0xff]
    %v1343 = vld [vmem:[%s2 + $0x178] sm:$0xff]
    %v1344 = vld [vmem:[%s2 + $0x180] sm:$0xff]
    %v1345 = vld [vmem:[%s2 + $0x188] sm:$0xff]
    %v1346 = vld [vmem:[%s2 + $0x190] sm:$0xff]
    %v1347 = vld [vmem:[%s2 + $0x198] sm:$0xff]
    %v1348 = vld [vmem:[%s2 + $0x1a0] sm:$0xff]
    %v1349 = vld [vmem:[%s2 + $0x1a8] sm:$0xff]
    %v1350 = vld [vmem:[%s2 + $0x1b0] sm:$0xff]
    %v1351 = vld [vmem:[%s2 + $0x1b8] sm:$0xff]
    %v1352 = vld [vmem:[%s2 + $0x1c0] sm:$0xff]
    %v1353 = vld [vmem:[%s2 + $0x1c8] sm:$0xff]
    %v1354 = vld [vmem:[%s2 + $0x1d0] sm:$0xff]
    %v1355 = vld [vmem:[%s2 + $0x1d8] sm:$0xff]
    %v1356 = vld [vmem:[%s2 + $0x1e0] sm:$0xff]
    %v1357 = vld [vmem:[%s2 + $0x1e8] sm:$0xff]
    %v1358 = vld [vmem:[%s2 + $0x1f0] sm:$0xff]
    %v1359 = vld [vmem:[%s2 + $0x1f8] sm:$0xff]
    %1361 = vst [vmem:[#allocation1] ss:$4 sm:$0xff] %v1295
    %v1362 = vld.sshfl [vmem:[#allocation1] sm:$0xff pattern:$0x73625140]
    %v1363 = vld.sshfl [vmem:[#allocation1 + $0x8] sm:$0xff pattern:$0x73625140]
    %1366 = vmatpush.msra.mxu0 %v1326
    %1367 = vmatpush.msra.mxu0 %v1324
    %1368 = vmatpush.msra.mxu0 %v1322
    %1369 = vmatpush.msra.mxu0 %v1320
    %1370 = vmatpush.msra.mxu0 %v1318
    %1371 = vmatpush.msra.mxu0 %v1316
    %1372 = vmatpush.msra.mxu0 %v1314
    %1373 = vmatpush.msra.mxu0 %v1312
    %1374 = vmatpush.msra.mxu0 %v1310
    %1375 = vmatpush.msra.mxu0 %v1308
    %1376 = vmatpush.msra.mxu0 %v1306
    %1377 = vmatpush.msra.mxu0 %v1304
    %1378 = vmatpush.msra.mxu0 %v1302
    %1379 = vmatpush.msra.mxu0 %v1300
    %1380 = vmatpush.msra.mxu0 %v1298
    %1381 = vmatpush.msra.mxu0 %v1296
    %1382 = vmatmul.f32.gmra.mxu0 %v1362
    %v1383 = vpop.f32.mrf.mxu0
    %v1384 = vadd.f32 0.0, %v1383
    %1385 = vdwg.mxu0
    %1386 = vmatpush.msra.mxu0 %v1358
    %1387 = vmatpush.msra.mxu0 %v1356
    %1388 = vmatpush.msra.mxu0 %v1354
    %1389 = vmatpush.msra.mxu0 %v1352
    %1390 = vmatpush.msra.mxu0 %v1350
    %1391 = vmatpush.msra.mxu0 %v1348
    %1392 = vmatpush.msra.mxu0 %v1346
    %1393 = vmatpush.msra.mxu0 %v1344
    %1394 = vmatpush.msra.mxu0 %v1342
    %1395 = vmatpush.msra.mxu0 %v1340
    %1396 = vmatpush.msra.mxu0 %v1338
    %1397 = vmatpush.msra.mxu0 %v1336
    %1398 = vmatpush.msra.mxu0 %v1334
    %1399 = vmatpush.msra.mxu0 %v1332
    %1400 = vmatpush.msra.mxu0 %v1330
    %1401 = vmatpush.msra.mxu0 %v1328
    %1402 = vmatmul.f32.gmra.mxu0 %v1363
    %v1403 = vpop.f32.mrf.mxu0
    %v1404 = vadd.f32 %v1384, %v1403
    %1405 = vdwg.mxu0
    %1406 = vmatpush.msra.mxu0 %v1327
    %1407 = vmatpush.msra.mxu0 %v1325
    %1408 = vmatpush.msra.mxu0 %v1323
    %1409 = vmatpush.msra.mxu0 %v1321
    %1410 = vmatpush.msra.mxu0 %v1319
    %1411 = vmatpush.msra.mxu0 %v1317
    %1412 = vmatpush.msra.mxu0 %v1315
    %1413 = vmatpush.msra.mxu0 %v1313
    %1414 = vmatpush.msra.mxu0 %v1311
    %1415 = vmatpush.msra.mxu0 %v1309
    %1416 = vmatpush.msra.mxu0 %v1307
    %1417 = vmatpush.msra.mxu0 %v1305
    %1418 = vmatpush.msra.mxu0 %v1303
    %1419 = vmatpush.msra.mxu0 %v1301
    %1420 = vmatpush.msra.mxu0 %v1299
    %1421 = vmatpush.msra.mxu0 %v1297
    %1422 = vmatmul.f32.gmra.mxu0 %v1362
    %v1423 = vpop.f32.mrf.mxu0
    %v1424 = vadd.f32 0.0, %v1423
    %1425 = vdwg.mxu0
    %1426 = vmatpush.msra.mxu0 %v1359
    %1427 = vmatpush.msra.mxu0 %v1357
    %1428 = vmatpush.msra.mxu0 %v1355
    %1429 = vmatpush.msra.mxu0 %v1353
    %1430 = vmatpush.msra.mxu0 %v1351
    %1431 = vmatpush.msra.mxu0 %v1349
    %1432 = vmatpush.msra.mxu0 %v1347
    %1433 = vmatpush.msra.mxu0 %v1345
    %1434 = vmatpush.msra.mxu0 %v1343
    %1435 = vmatpush.msra.mxu0 %v1341
    %1436 = vmatpush.msra.mxu0 %v1339
    %1437 = vmatpush.msra.mxu0 %v1337
    %1438 = vmatpush.msra.mxu0 %v1335
    %1439 = vmatpush.msra.mxu0 %v1333
    %1440 = vmatpush.msra.mxu0 %v1331
    %1441 = vmatpush.msra.mxu0 %v1329
    %1442 = vmatmul.f32.gmra.mxu0 %v1363
    %v1443 = vpop.f32.mrf.mxu0
    %v1444 = vadd.f32 %v1424, %v1443
    %1445 = vdwg.mxu0
    %s1446 = scalar_lea.vmem [#allocation3], 12
    %v1447 = vld [vmem:[%s1446] sm:$0x3]
    %v1448 = vadd.f32 %v1447, %v1404
    %v1449 = vtanh.pop %v1448
    %v1450 = vld [vmem:[%s3] sm:$0xff]
    %v1451 = vld [vmem:[%s3 + $0x8] sm:$0xff]
    %v1452 = vld [vmem:[%s3 + $0x10] sm:$0xff]
    %v1453 = vld [vmem:[%s3 + $0x18] sm:$0xff]
    %v1454 = vld [vmem:[%s3 + $0x20] sm:$0xff]
    %v1455 = vld [vmem:[%s3 + $0x28] sm:$0xff]
    %v1456 = vld [vmem:[%s3 + $0x30] sm:$0xff]
    %v1457 = vld [vmem:[%s3 + $0x38] sm:$0xff]
    %v1458 = vld [vmem:[%s3 + $0x40] sm:$0xff]
    %v1459 = vld [vmem:[%s3 + $0x48] sm:$0xff]
    %v1460 = vld [vmem:[%s3 + $0x50] sm:$0xff]
    %v1461 = vld [vmem:[%s3 + $0x58] sm:$0xff]
    %v1462 = vld [vmem:[%s3 + $0x60] sm:$0xff]
    %v1463 = vld [vmem:[%s3 + $0x68] sm:$0xff]
    %v1464 = vld [vmem:[%s3 + $0x70] sm:$0xff]
    %v1465 = vld [vmem:[%s3 + $0x78] sm:$0xff]
    %1466 = vmatpush.msra.mxu0 %v1465
    %1467 = vmatpush.msra.mxu0 %v1464
    %1468 = vmatpush.msra.mxu0 %v1463
    %1469 = vmatpush.msra.mxu0 %v1462
    %1470 = vmatpush.msra.mxu0 %v1461
    %1471 = vmatpush.msra.mxu0 %v1460
    %1472 = vmatpush.msra.mxu0 %v1459
    %1473 = vmatpush.msra.mxu0 %v1458
    %1474 = vmatpush.msra.mxu0 %v1457
    %1475 = vmatpush.msra.mxu0 %v1456
    %1476 = vmatpush.msra.mxu0 %v1455
    %1477 = vmatpush.msra.mxu0 %v1454
    %1478 = vmatpush.msra.mxu0 %v1453
    %1479 = vmatpush.msra.mxu0 %v1452
    %1480 = vmatpush.msra.mxu0 %v1451
    %1481 = vmatpush.msra.mxu0 %v1450
    %1482 = vmatmul.f32.gmra.mxu0 %v1449
    %v1483 = vpop.f32.mrf.mxu0
    %v1484 = vadd.f32 %v1444, %v1483
    %1485 = vdwg.mxu0
    %v1486 = vadd.f32 %v1484, %v113
    %v1487 = vtanh.pop %v1486
    %1488 = vst [vmem:[#allocation2] sm:$0x3] %v1449
    %1489 = vst [vmem:[#allocation2 + $0x2] sm:$0x3] %v1487
    %s1490 = scalar_lea.vmem %s6, 12
    %1491 = vst [vmem:[%s1490] sm:$0x3] %v1487
    %v1492 = vld [vmem:[#allocation2] sm:$0xf]
    %v1493 = vld [vmem:[%s2] sm:$0xff]
    %v1494 = vld [vmem:[%s2 + $0x8] sm:$0xff]
    %v1495 = vld [vmem:[%s2 + $0x10] sm:$0xff]
    %v1496 = vld [vmem:[%s2 + $0x18] sm:$0xff]
    %v1497 = vld [vmem:[%s2 + $0x20] sm:$0xff]
    %v1498 = vld [vmem:[%s2 + $0x28] sm:$0xff]
    %v1499 = vld [vmem:[%s2 + $0x30] sm:$0xff]
    %v1500 = vld [vmem:[%s2 + $0x38] sm:$0xff]
    %v1501 = vld [vmem:[%s2 + $0x40] sm:$0xff]
    %v1502 = vld [vmem:[%s2 + $0x48] sm:$0xff]
    %v1503 = vld [vmem:[%s2 + $0x50] sm:$0xff]
    %v1504 = vld [vmem:[%s2 + $0x58] sm:$0xff]
    %v1505 = vld [vmem:[%s2 + $0x60] sm:$0xff]
    %v1506 = vld [vmem:[%s2 + $0x68] sm:$0xff]
    %v1507 = vld [vmem:[%s2 + $0x70] sm:$0xff]
    %v1508 = vld [vmem:[%s2 + $0x78] sm:$0xff]
    %v1509 = vld [vmem:[%s2 + $0x80] sm:$0xff]
    %v1510 = vld [vmem:[%s2 + $0x88] sm:$0xff]
    %v1511 = vld [vmem:[%s2 + $0x90] sm:$0xff]
    %v1512 = vld [vmem:[%s2 + $0x98] sm:$0xff]
    %v1513 = vld [vmem:[%s2 + $0xa0] sm:$0xff]
    %v1514 = vld [vmem:[%s2 + $0xa8] sm:$0xff]
    %v1515 = vld [vmem:[%s2 + $0xb0] sm:$0xff]
    %v1516 = vld [vmem:[%s2 + $0xb8] sm:$0xff]
    %v1517 = vld [vmem:[%s2 + $0xc0] sm:$0xff]
    %v1518 = vld [vmem:[%s2 + $0xc8] sm:$0xff]
    %v1519 = vld [vmem:[%s2 + $0xd0] sm:$0xff]
    %v1520 = vld [vmem:[%s2 + $0xd8] sm:$0xff]
    %v1521 = vld [vmem:[%s2 + $0xe0] sm:$0xff]
    %v1522 = vld [vmem:[%s2 + $0xe8] sm:$0xff]
    %v1523 = vld [vmem:[%s2 + $0xf0] sm:$0xff]
    %v1524 = vld [vmem:[%s2 + $0xf8] sm:$0xff]
    %v1525 = vld [vmem:[%s2 + $0x100] sm:$0xff]
    %v1526 = vld [vmem:[%s2 + $0x108] sm:$0xff]
    %v1527 = vld [vmem:[%s2 + $0x110] sm:$0xff]
    %v1528 = vld [vmem:[%s2 + $0x118] sm:$0xff]
    %v1529 = vld [vmem:[%s2 + $0x120] sm:$0xff]
    %v1530 = vld [vmem:[%s2 + $0x128] sm:$0xff]
    %v1531 = vld [vmem:[%s2 + $0x130] sm:$0xff]
    %v1532 = vld [vmem:[%s2 + $0x138] sm:$0xff]
    %v1533 = vld [vmem:[%s2 + $0x140] sm:$0xff]
    %v1534 = vld [vmem:[%s2 + $0x148] sm:$0xff]
    %v1535 = vld [vmem:[%s2 + $0x150] sm:$0xff]
    %v1536 = vld [vmem:[%s2 + $0x158] sm:$0xff]
    %v1537 = vld [vmem:[%s2 + $0x160] sm:$0xff]
    %v1538 = vld [vmem:[%s2 + $0x168] sm:$0xff]
    %v1539 = vld [vmem:[%s2 + $0x170] sm:$0xff]
    %v1540 = vld [vmem:[%s2 + $0x178] sm:$0xff]
    %v1541 = vld [vmem:[%s2 + $0x180] sm:$0xff]
    %v1542 = vld [vmem:[%s2 + $0x188] sm:$0xff]
    %v1543 = vld [vmem:[%s2 + $0x190] sm:$0xff]
    %v1544 = vld [vmem:[%s2 + $0x198] sm:$0xff]
    %v1545 = vld [vmem:[%s2 + $0x1a0] sm:$0xff]
    %v1546 = vld [vmem:[%s2 + $0x1a8] sm:$0xff]
    %v1547 = vld [vmem:[%s2 + $0x1b0] sm:$0xff]
    %v1548 = vld [vmem:[%s2 + $0x1b8] sm:$0xff]
    %v1549 = vld [vmem:[%s2 + $0x1c0] sm:$0xff]
    %v1550 = vld [vmem:[%s2 + $0x1c8] sm:$0xff]
    %v1551 = vld [vmem:[%s2 + $0x1d0] sm:$0xff]
    %v1552 = vld [vmem:[%s2 + $0x1d8] sm:$0xff]
    %v1553 = vld [vmem:[%s2 + $0x1e0] sm:$0xff]
    %v1554 = vld [vmem:[%s2 + $0x1e8] sm:$0xff]
    %v1555 = vld [vmem:[%s2 + $0x1f0] sm:$0xff]
    %v1556 = vld [vmem:[%s2 + $0x1f8] sm:$0xff]
    %1558 = vst [vmem:[#allocation1] ss:$4 sm:$0xff] %v1492
    %v1559 = vld.sshfl [vmem:[#allocation1] sm:$0xff pattern:$0x73625140]
    %v1560 = vld.sshfl [vmem:[#allocation1 + $0x8] sm:$0xff pattern:$0x73625140]
    %1563 = vmatpush.msra.mxu0 %v1523
    %1564 = vmatpush.msra.mxu0 %v1521
    %1565 = vmatpush.msra.mxu0 %v1519
    %1566 = vmatpush.msra.mxu0 %v1517
    %1567 = vmatpush.msra.mxu0 %v1515
    %1568 = vmatpush.msra.mxu0 %v1513
    %1569 = vmatpush.msra.mxu0 %v1511
    %1570 = vmatpush.msra.mxu0 %v1509
    %1571 = vmatpush.msra.mxu0 %v1507
    %1572 = vmatpush.msra.mxu0 %v1505
    %1573 = vmatpush.msra.mxu0 %v1503
    %1574 = vmatpush.msra.mxu0 %v1501
    %1575 = vmatpush.msra.mxu0 %v1499
    %1576 = vmatpush.msra.mxu0 %v1497
    %1577 = vmatpush.msra.mxu0 %v1495
    %1578 = vmatpush.msra.mxu0 %v1493
    %1579 = vmatmul.f32.gmra.mxu0 %v1559
    %v1580 = vpop.f32.mrf.mxu0
    %v1581 = vadd.f32 0.0, %v1580
    %1582 = vdwg.mxu0
    %1583 = vmatpush.msra.mxu0 %v1555
    %1584 = vmatpush.msra.mxu0 %v1553
    %1585 = vmatpush.msra.mxu0 %v1551
    %1586 = vmatpush.msra.mxu0 %v1549
    %1587 = vmatpush.msra.mxu0 %v1547
    %1588 = vmatpush.msra.mxu0 %v1545
    %1589 = vmatpush.msra.mxu0 %v1543
    %1590 = vmatpush.msra.mxu0 %v1541
    %1591 = vmatpush.msra.mxu0 %v1539
    %1592 = vmatpush.msra.mxu0 %v1537
    %1593 = vmatpush.msra.mxu0 %v1535
    %1594 = vmatpush.msra.mxu0 %v1533
    %1595 = vmatpush.msra.mxu0 %v1531
    %1596 = vmatpush.msra.mxu0 %v1529
    %1597 = vmatpush.msra.mxu0 %v1527
    %1598 = vmatpush.msra.mxu0 %v1525
    %1599 = vmatmul.f32.gmra.mxu0 %v1560
    %v1600 = vpop.f32.mrf.mxu0
    %v1601 = vadd.f32 %v1581, %v1600
    %1602 = vdwg.mxu0
    %1603 = vmatpush.msra.mxu0 %v1524
    %1604 = vmatpush.msra.mxu0 %v1522
    %1605 = vmatpush.msra.mxu0 %v1520
    %1606 = vmatpush.msra.mxu0 %v1518
    %1607 = vmatpush.msra.mxu0 %v1516
    %1608 = vmatpush.msra.mxu0 %v1514
    %1609 = vmatpush.msra.mxu0 %v1512
    %1610 = vmatpush.msra.mxu0 %v1510
    %1611 = vmatpush.msra.mxu0 %v1508
    %1612 = vmatpush.msra.mxu0 %v1506
    %1613 = vmatpush.msra.mxu0 %v1504
    %1614 = vmatpush.msra.mxu0 %v1502
    %1615 = vmatpush.msra.mxu0 %v1500
    %1616 = vmatpush.msra.mxu0 %v1498
    %1617 = vmatpush.msra.mxu0 %v1496
    %1618 = vmatpush.msra.mxu0 %v1494
    %1619 = vmatmul.f32.gmra.mxu0 %v1559
    %v1620 = vpop.f32.mrf.mxu0
    %v1621 = vadd.f32 0.0, %v1620
    %1622 = vdwg.mxu0
    %1623 = vmatpush.msra.mxu0 %v1556
    %1624 = vmatpush.msra.mxu0 %v1554
    %1625 = vmatpush.msra.mxu0 %v1552
    %1626 = vmatpush.msra.mxu0 %v1550
    %1627 = vmatpush.msra.mxu0 %v1548
    %1628 = vmatpush.msra.mxu0 %v1546
    %1629 = vmatpush.msra.mxu0 %v1544
    %1630 = vmatpush.msra.mxu0 %v1542
    %1631 = vmatpush.msra.mxu0 %v1540
    %1632 = vmatpush.msra.mxu0 %v1538
    %1633 = vmatpush.msra.mxu0 %v1536
    %1634 = vmatpush.msra.mxu0 %v1534
    %1635 = vmatpush.msra.mxu0 %v1532
    %1636 = vmatpush.msra.mxu0 %v1530
    %1637 = vmatpush.msra.mxu0 %v1528
    %1638 = vmatpush.msra.mxu0 %v1526
    %1639 = vmatmul.f32.gmra.mxu0 %v1560
    %v1640 = vpop.f32.mrf.mxu0
    %v1641 = vadd.f32 %v1621, %v1640
    %1642 = vdwg.mxu0
    %s1643 = scalar_lea.vmem [#allocation3], 14
    %v1644 = vld [vmem:[%s1643] sm:$0x3]
    %v1645 = vadd.f32 %v1644, %v1601
    %v1646 = vtanh.pop %v1645
    %v1647 = vld [vmem:[%s3] sm:$0xff]
    %v1648 = vld [vmem:[%s3 + $0x8] sm:$0xff]
    %v1649 = vld [vmem:[%s3 + $0x10] sm:$0xff]
    %v1650 = vld [vmem:[%s3 + $0x18] sm:$0xff]
    %v1651 = vld [vmem:[%s3 + $0x20] sm:$0xff]
    %v1652 = vld [vmem:[%s3 + $0x28] sm:$0xff]
    %v1653 = vld [vmem:[%s3 + $0x30] sm:$0xff]
    %v1654 = vld [vmem:[%s3 + $0x38] sm:$0xff]
    %v1655 = vld [vmem:[%s3 + $0x40] sm:$0xff]
    %v1656 = vld [vmem:[%s3 + $0x48] sm:$0xff]
    %v1657 = vld [vmem:[%s3 + $0x50] sm:$0xff]
    %v1658 = vld [vmem:[%s3 + $0x58] sm:$0xff]
    %v1659 = vld [vmem:[%s3 + $0x60] sm:$0xff]
    %v1660 = vld [vmem:[%s3 + $0x68] sm:$0xff]
    %v1661 = vld [vmem:[%s3 + $0x70] sm:$0xff]
    %v1662 = vld [vmem:[%s3 + $0x78] sm:$0xff]
    %1663 = vmatpush.msra.mxu0 %v1662
    %1664 = vmatpush.msra.mxu0 %v1661
    %1665 = vmatpush.msra.mxu0 %v1660
    %1666 = vmatpush.msra.mxu0 %v1659
    %1667 = vmatpush.msra.mxu0 %v1658
    %1668 = vmatpush.msra.mxu0 %v1657
    %1669 = vmatpush.msra.mxu0 %v1656
    %1670 = vmatpush.msra.mxu0 %v1655
    %1671 = vmatpush.msra.mxu0 %v1654
    %1672 = vmatpush.msra.mxu0 %v1653
    %1673 = vmatpush.msra.mxu0 %v1652
    %1674 = vmatpush.msra.mxu0 %v1651
    %1675 = vmatpush.msra.mxu0 %v1650
    %1676 = vmatpush.msra.mxu0 %v1649
    %1677 = vmatpush.msra.mxu0 %v1648
    %1678 = vmatpush.msra.mxu0 %v1647
    %1679 = vmatmul.f32.gmra.mxu0 %v1646
    %v1680 = vpop.f32.mrf.mxu0
    %v1681 = vadd.f32 %v1641, %v1680
    %1682 = vdwg.mxu0
    %v1683 = vadd.f32 %v1681, %v113
    %v1684 = vtanh.pop %v1683
    %1685 = vst [vmem:[#allocation2] sm:$0x3] %v1646
    %1686 = vst [vmem:[#allocation2 + $0x2] sm:$0x3] %v1684
    %s1687 = scalar_lea.vmem %s6, 14
    %1688 = vst [vmem:[%s1687] sm:$0x3] %v1684
    // Predicated region
    $region30: #{rnn_forward.1} parent=1 // pred_check
      %p1689 = pneg %p26
    $region31: #{rnn_forward.1} parent=1 // pred_check_branch
      %1691 = sbr.rel (%p1689) target = $region33
    $region32: #{rnn_forward.1} parent=1 // pred_region
      %v1692 = vld [vmem:[#allocation2] sm:$0x3]
      %1693 = vst [vmem:[#allocation4] sm:$0x3] %v1692
      %v1694 = vld [vmem:[#allocation2 + $0x2] sm:$0x3]
      %s1695 = scalar_lea.vmem [#allocation4], 2
      %1696 = vst [vmem:[%s1695] sm:$0x3] %v1694
    $region33: #{rnn_forward.1} parent=1 // pred_fallthru
      _
    // Predicated region
    $region34: #{rnn_forward.1} parent=1 // pred_check
      _
    $region35: #{rnn_forward.1} parent=1 // pred_check_branch
      %1698 = sbr.rel (0) target = $region37
    $region36: #{rnn_forward.1} parent=1 // pred_region
      _
    $region37: #{rnn_forward.1} parent=1 // pred_fallthru
      _
    // Predicated region
    $region38: #{rnn_forward.1} parent=1 // pred_check
      _
    $region39: #{rnn_forward.1} parent=1 // pred_check_branch
      %1700 = sbr.rel (0) target = $region41
    $region40: #{rnn_forward.1} parent=1 // pred_region
      %1702 = vsyncadd [#allocation5], 0
      %s1703 = sshll.u32 [#allocation4], 4
      %s1704 = int_to_ptr.vmem [resolvable:$true] %s1703
      %s1705 = sshll.u32 %s7, 4
      %s1706 = int_to_ptr.hbm [resolvable:$true] %s1705
      %1711 = dma.vmem_to_hbm [thread:$0]  %s1704, 64, %s1706, [#allocation5], 32, 32, 2
    $region41: #{rnn_forward.1} parent=1 // pred_fallthru
      _
    // Predicated region
    $region42: #{rnn_forward.1} parent=1 // pred_check
      _
    $region43: #{rnn_forward.1} parent=1 // pred_check_branch
      %1713 = sbr.rel (0) target = $region45
    $region44: #{rnn_forward.1} parent=1 // pred_region
      _
    $region45: #{rnn_forward.1} parent=1 // pred_fallthru
      _
    // Predicated region
    $region46: #{rnn_forward.1} parent=1 // pred_check
      _
    $region47: #{rnn_forward.1} parent=1 // pred_check_branch
      %1715 = sbr.rel (0) target = $region49
    $region48: #{rnn_forward.1} parent=1 // pred_region
      %1717 = dma.done [#allocation5], 64
    $region49: #{rnn_forward.1} parent=1 // pred_fallthru
      _
    %1718 = vsyncpa [#allocation5], 1

</llo_original>
